<compile_context>
chip_gen: v5e
topology: v5e:2x2
jax: 0.10.0
libtpu: 0.0.40
codegen_flags: <defaults>
</compile_context>

<pallas_src>
import numpy as np
import jax
import jax.numpy as jnp
from jax.experimental import pallas as pl
from jax.experimental.pallas import tpu as pltpu


def _round_up(v, m):
    return (v + m - 1) // m * m


def _device_defaults():
    """Generation-aware (activation dtype, scoped-VMEM limit)."""
    try:
        kind = jax.devices()[0].device_kind.lower()
    except Exception:
        kind = ""
    if "v5 lite" in kind or "v5lite" in kind or "v5e" in kind:
        # v5e: no bf16 VPU path -> f32 epilogue/activations; 128 MiB physical VMEM.
        return jnp.float32, 100 * 1024 * 1024
    if "v7" in kind:
        # v7x: bf16 VPU, but only 64 MiB physical VMEM -> cap below that.
        return jnp.bfloat16, 48 * 1024 * 1024
    if "v6" in kind:
        return jnp.bfloat16, 100 * 1024 * 1024
    # Unknown generation: conservative (leave the compiler's default VMEM limit).
    return jnp.float32, None


# ----------------------------------------------------------------------------
# Kernel: fused 3-layer ReLU MLP.
#   grid = (batch_tiles, out_tiles)
#   Layers 1-2 are computed once per batch tile (when out-tile index == 0) and
#   cached in the VMEM scratch z2_ref; layer 3 streams one lane-dense N-tile
#   of W3 / b3 / out per grid step.
# ----------------------------------------------------------------------------
def _hypernet_kernel(x_ref, w1_ref, b1_ref, w2_ref, b2_ref, w3_ref, b3_ref,
                     out_ref, z2_ref):
    @pl.when(pl.program_id(1) == 0)
    def _():
        # Layer 1: K is tiny (8 padded) -> keep the matmul in f32 for accuracy.
        z1 = jnp.dot(x_ref[...], w1_ref[...],
                     preferred_element_type=jnp.float32)
        z1 = jnp.maximum(z1 + b1_ref[...], 0.0)
        # Layer 2: bf16 MXU path, f32 accumulation.
        z2 = jnp.dot(z1.astype(jnp.bfloat16), w2_ref[...],
                     preferred_element_type=jnp.float32)
        z2 = jnp.maximum(z2 + b2_ref[...], 0.0)
        z2_ref[...] = z2.astype(z2_ref.dtype)       # cached for all N-tiles

    # Layer 3: one output N-tile per grid step.
    z3 = jnp.dot(z2_ref[...].astype(jnp.bfloat16), w3_ref[...],
                 preferred_element_type=jnp.float32)
    z3 = jnp.maximum(z3 + b3_ref[...], 0.0)
    out_ref[...] = z3.astype(out_ref.dtype)


# ----------------------------------------------------------------------------
# One-time parameter relayout (call once, cache the result).
#   weights[i]: (out_i, in_i) torch nn.Linear convention, biases[i]: (out_i,)
# ----------------------------------------------------------------------------
def prepare_hypernet_params(weights, biases, *, tile_n=512):
    d_in = int(weights[0].shape[1])
    d1 = int(weights[0].shape[0])
    d2 = int(weights[1].shape[0])
    d3 = int(weights[2].shape[0])

    d_in_p = max(8, _round_up(d_in, 8))               # 6  -> 8 (sublane multiple)
    d1_p = _round_up(d1, 128)                         # 150 -> 256
    d2_p = _round_up(d2, 128)                         # 500 -> 512
    d3_p = _round_up(d3, 128)
    tile_n = _round_up(min(int(tile_n), d3_p), 128)   # lane-dense N tile
    d3_p = _round_up(d3_p, tile_n)                    # grid_n * tile_n

    def pad_wT(w, in_p, out_p, dtype):
        out_d, in_d = w.shape
        wt = jnp.zeros((in_p, out_p), jnp.float32)
        wt = wt.at[:in_d, :out_d].set(jnp.asarray(w, jnp.float32).T)
        return wt.astype(dtype)

    def pad_b(b, out_p):
        bp = jnp.zeros((1, out_p), jnp.float32)
        return bp.at[0, : b.shape[0]].set(jnp.asarray(b, jnp.float32))

    return dict(
        w1=pad_wT(weights[0], d_in_p, d1_p, jnp.float32),   # layer 1 stays f32
        b1=pad_b(biases[0], d1_p),
        w2=pad_wT(weights[1], d1_p, d2_p, jnp.bfloat16),
        b2=pad_b(biases[1], d2_p),
        w3=pad_wT(weights[2], d2_p, d3_p, jnp.bfloat16),
        b3=pad_b(biases[2], d3_p),
        dims=(d_in, d1, d2, d3),
        dims_p=(d_in_p, d1_p, d2_p, d3_p),
        tile_n=tile_n,
    )


# ----------------------------------------------------------------------------
# Forward wrapper.
# ----------------------------------------------------------------------------
def hypernetwork_forward(tx_x, tx_y, params, *, block_m=None,
                         out_dtype=jnp.float32, act_dtype=None,
                         vmem_limit_bytes=None):
    d_in, d1, d2, d3 = params["dims"]
    d_in_p, d1_p, d2_p, d3_p = params["dims_p"]
    tile_n = params["tile_n"]

    auto_act, auto_vmem = _device_defaults()
    if act_dtype is None:
        act_dtype = auto_act
    if vmem_limit_bytes is None:
        vmem_limit_bytes = auto_vmem

    x = jnp.concatenate([tx_x, tx_y], axis=1).astype(jnp.float32)
    B, f_in = x.shape
    assert f_in == d_in, "input feature dim does not match prepared params"

    if block_m is None:
        if B >= 1024:
            block_m = 512
        elif B >= 512:
            block_m = 256
        else:
            block_m = 128

    B_p = _round_up(B, block_m)
    pad_rows, pad_cols = B_p - B, d_in_p - f_in
    if pad_rows or pad_cols:
        x = jnp.pad(x, ((0, pad_rows), (0, pad_cols)))

    grid_m = B_p // block_m
    grid_n = d3_p // tile_n

    const_map = lambda i, j: (0, 0)
    in_specs = [
        # x tile: changes per batch step -> default double-buffering.
        pl.BlockSpec((block_m, d_in_p), lambda i, j: (i, 0)),
        # Grid-invariant params -> single-buffered (half the resident VMEM).
        pl.BlockSpec((d_in_p, d1_p), const_map, pipeline_mode=pl.Buffered(1)),
        pl.BlockSpec((1, d1_p), const_map, pipeline_mode=pl.Buffered(1)),
        pl.BlockSpec((d1_p, d2_p), const_map, pipeline_mode=pl.Buffered(1)),
        pl.BlockSpec((1, d2_p), const_map, pipeline_mode=pl.Buffered(1)),
        # Last-layer weight/bias: tiled along N -> keep default buffering.
        pl.BlockSpec((d2_p, tile_n), lambda i, j: (0, j)),
        pl.BlockSpec((1, tile_n), lambda i, j: (0, j)),
    ]
    out_spec = pl.BlockSpec((block_m, tile_n), lambda i, j: (i, j))

    cp_kwargs = dict(dimension_semantics=("parallel", "arbitrary"))
    if vmem_limit_bytes is not None:
        cp_kwargs["vmem_limit_bytes"] = int(vmem_limit_bytes)

    out_padded = pl.pallas_call(
        _hypernet_kernel,
        out_shape=jax.ShapeDtypeStruct((B_p, d3_p), out_dtype),
        grid_spec=pltpu.PrefetchScalarGridSpec(
            num_scalar_prefetch=0,
            grid=(grid_m, grid_n),
            in_specs=in_specs,
            out_specs=out_spec,
            scratch_shapes=[pltpu.VMEM((block_m, d2_p), act_dtype)],
        ),
        compiler_params=pltpu.CompilerParams(**cp_kwargs),
    )(x, params["w1"], params["b1"], params["w2"], params["b2"],
      params["w3"], params["b3"])

    if B_p != B or d3_p != d3:
        out_padded = out_padded[:B, :d3]
    return out_padded


# ----------------------------------------------------------------------------
# Parameter construction (mirrors hypernetwork.__init__: xavier W, zero bias)
# ----------------------------------------------------------------------------
def build_params(key, total_weights_num):
    sizes = [6, 150, 500, total_weights_num]
    weights, biases = [], []
    for fan_in, fan_out in zip(sizes[:-1], sizes[1:]):
        key, sub = jax.random.split(key)
        bound = float(np.sqrt(6.0 / (fan_in + fan_out)))
        weights.append(jax.random.uniform(sub, (fan_out, fan_in),
                                          jnp.float32, -bound, bound))
        biases.append(jnp.zeros((fan_out,), jnp.float32))
    return weights, biases


# ----------------------------------------------------------------------------
# Pure-JAX f32 reference (for the correctness check)
# ----------------------------------------------------------------------------
def reference_forward(tx_x, tx_y, weights, biases):
    z = jnp.concatenate([tx_x, tx_y], axis=1).astype(jnp.float32)
    for w, b in zip(weights, biases):
        z = jnp.maximum(z @ w.T + jnp.reshape(b, (1, -1)), 0.0)
    return z


# ----------------------------------------------------------------------------
if __name__ == "__main__":
    total_weights_num = 200     # size of the predicted flat weight vector
    batch = 256                 # -> 2 parallel 128-row batch tiles
    key = jax.random.PRNGKey(0)
    k_w, k_x, k_y = jax.random.split(key, 3)

    weights, biases = build_params(k_w, total_weights_num)
    params = prepare_hypernet_params(weights, biases)   # one-time relayout

    tx_x = jax.random.normal(k_x, (batch, 3), jnp.float32)
    tx_y = jax.random.normal(k_y, (batch, 3), jnp.float32)

    out = hypernetwork_forward(tx_x, tx_y, params)
    out = jax.block_until_ready(out)

    ref = reference_forward(tx_x, tx_y, weights, biases)
    # Layers 2-3 use bf16 matmuls (f32 accumulation) -> relaxed tolerance.
    np.testing.assert_allclose(np.asarray(out), np.asarray(ref),
                               rtol=2e-2, atol=1e-2)
    print("KERNEL_OK")
</pallas_src>

<mosaic_0001>
module attributes {stable_mosaic.version = 11 : i64} {
  func.func @_hypernet_kernel(%arg0: i32, %arg1: i32, %arg2: memref<128x8xf32, #tpu.memory_space<vmem>>, %arg3: memref<8x256xf32, #tpu.memory_space<vmem>>, %arg4: memref<1x256xf32, #tpu.memory_space<vmem>>, %arg5: memref<256x512xbf16, #tpu.memory_space<vmem>>, %arg6: memref<1x512xf32, #tpu.memory_space<vmem>>, %arg7: memref<512x256xbf16, #tpu.memory_space<vmem>>, %arg8: memref<1x256xf32, #tpu.memory_space<vmem>>, %arg9: memref<128x256xf32, #tpu.memory_space<vmem>>, %arg10: memref<128x512xf32, #tpu.memory_space<vmem>>) attributes {dimension_semantics = [#tpu.dimension_semantics<parallel>, #tpu.dimension_semantics<arbitrary>], iteration_bounds = array<i64: 2, 1>, scalar_prefetch = 0 : i64, scratch_operands = 1 : i64, tpu.core_type = #tpu.core_type<tc>, window_params = [{transform_indices = @transform_0, window_bounds = array<i64: 128, 8>}, {pipeline_mode = #tpu.pipeline_mode<synchronous>, transform_indices = @transform_1, window_bounds = array<i64: 8, 256>}, {pipeline_mode = #tpu.pipeline_mode<synchronous>, transform_indices = @transform_2, window_bounds = array<i64: 1, 256>}, {pipeline_mode = #tpu.pipeline_mode<synchronous>, transform_indices = @transform_3, window_bounds = array<i64: 256, 512>}, {pipeline_mode = #tpu.pipeline_mode<synchronous>, transform_indices = @transform_4, window_bounds = array<i64: 1, 512>}, {transform_indices = @transform_5, window_bounds = array<i64: 512, 256>}, {transform_indices = @transform_6, window_bounds = array<i64: 1, 256>}, {transform_indices = @transform_7, window_bounds = array<i64: 128, 256>}]} {
    %c0_i32 = arith.constant 0 : i32
    %0 = arith.cmpi eq, %arg1, %c0_i32 : i32
    %1 = arith.extui %0 : i1 to i32
    %c0_i32_0 = arith.constant 0 : i32
    %2 = arith.cmpi ne, %1, %c0_i32_0 : i32
    scf.if %2 {
      %c0_9 = arith.constant 0 : index
      %c0_10 = arith.constant 0 : index
      %13 = vector.load %arg2[%c0_9, %c0_10] : memref<128x8xf32, #tpu.memory_space<vmem>>, vector<128x8xf32>
      %c0_11 = arith.constant 0 : index
      %c0_12 = arith.constant 0 : index
      %14 = vector.load %arg3[%c0_11, %c0_12] : memref<8x256xf32, #tpu.memory_space<vmem>>, vector<8x256xf32>
      %cst_13 = arith.constant dense<0.000000e+00> : vector<128x256xf32>
      %15 = tpu.matmul %13, %14, %cst_13 {dimension_numbers = #tpu.dot_dimension_numbers<[1], [0], [0], [1], [0, 0, 1, 1], [], []>} : vector<128x8xf32>, vector<8x256xf32>, vector<128x256xf32> -> vector<128x256xf32>
      %c0_14 = arith.constant 0 : index
      %c0_15 = arith.constant 0 : index
      %16 = vector.load %arg4[%c0_14, %c0_15] : memref<1x256xf32, #tpu.memory_space<vmem>>, vector<1x256xf32>
      %17 = vector.broadcast %16 : vector<1x256xf32> to vector<128x256xf32>
      %18 = arith.addf %15, %17 : vector<128x256xf32>
      %cst_16 = arith.constant 0.000000e+00 : f32
      %19 = vector.broadcast %cst_16 : f32 to vector<128x256xf32>
      %20 = arith.maximumf %18, %19 : vector<128x256xf32>
      %21 = arith.truncf %20 : vector<128x256xf32> to vector<128x256xbf16>
      %c0_17 = arith.constant 0 : index
      %c0_18 = arith.constant 0 : index
      %22 = vector.load %arg5[%c0_17, %c0_18] : memref<256x512xbf16, #tpu.memory_space<vmem>>, vector<256x512xbf16>
      %cst_19 = arith.constant dense<0.000000e+00> : vector<128x512xf32>
      %23 = tpu.matmul %21, %22, %cst_19 {dimension_numbers = #tpu.dot_dimension_numbers<[1], [0], [0], [1], [0, 0, 1, 1], [], []>} : vector<128x256xbf16>, vector<256x512xbf16>, vector<128x512xf32> -> vector<128x512xf32>
      %c0_20 = arith.constant 0 : index
      %c0_21 = arith.constant 0 : index
      %24 = vector.load %arg6[%c0_20, %c0_21] : memref<1x512xf32, #tpu.memory_space<vmem>>, vector<1x512xf32>
      %25 = vector.broadcast %24 : vector<1x512xf32> to vector<128x512xf32>
      %26 = arith.addf %23, %25 : vector<128x512xf32>
      %cst_22 = arith.constant 0.000000e+00 : f32
      %27 = vector.broadcast %cst_22 : f32 to vector<128x512xf32>
      %28 = arith.maximumf %26, %27 : vector<128x512xf32>
      %c0_23 = arith.constant 0 : index
      %c0_24 = arith.constant 0 : index
      %29 = vector.load %arg10[%c0_23, %c0_24] : memref<128x512xf32, #tpu.memory_space<vmem>>, vector<128x512xf32>
      tpu.vector_store %arg10[%c0_23, %c0_24], %28 {strides = array<i32>} : memref<128x512xf32, #tpu.memory_space<vmem>>, vector<128x512xf32>,
    } else {
    }
    %c0 = arith.constant 0 : index
    %c0_1 = arith.constant 0 : index
    %3 = vector.load %arg10[%c0, %c0_1] : memref<128x512xf32, #tpu.memory_space<vmem>>, vector<128x512xf32>
    %4 = arith.truncf %3 : vector<128x512xf32> to vector<128x512xbf16>
    %c0_2 = arith.constant 0 : index
    %c0_3 = arith.constant 0 : index
    %5 = vector.load %arg7[%c0_2, %c0_3] : memref<512x256xbf16, #tpu.memory_space<vmem>>, vector<512x256xbf16>
    %cst = arith.constant dense<0.000000e+00> : vector<128x256xf32>
    %6 = tpu.matmul %4, %5, %cst {dimension_numbers = #tpu.dot_dimension_numbers<[1], [0], [0], [1], [0, 0, 1, 1], [], []>} : vector<128x512xbf16>, vector<512x256xbf16>, vector<128x256xf32> -> vector<128x256xf32>
    %c0_4 = arith.constant 0 : index
    %c0_5 = arith.constant 0 : index
    %7 = vector.load %arg8[%c0_4, %c0_5] : memref<1x256xf32, #tpu.memory_space<vmem>>, vector<1x256xf32>
    %8 = vector.broadcast %7 : vector<1x256xf32> to vector<128x256xf32>
    %9 = arith.addf %6, %8 : vector<128x256xf32>
    %cst_6 = arith.constant 0.000000e+00 : f32
    %10 = vector.broadcast %cst_6 : f32 to vector<128x256xf32>
    %11 = arith.maximumf %9, %10 : vector<128x256xf32>
    %c0_7 = arith.constant 0 : index
    %c0_8 = arith.constant 0 : index
    %12 = vector.load %arg9[%c0_7, %c0_8] : memref<128x256xf32, #tpu.memory_space<vmem>>, vector<128x256xf32>
    tpu.vector_store %arg9[%c0_7, %c0_8], %11 {strides = array<i32>} : memref<128x256xf32, #tpu.memory_space<vmem>>, vector<128x256xf32>,
    return
  }
  func.func @transform_0(%arg0: i32, %arg1: i32) -> (i32, i32) {
    %c0_i32 = arith.constant 0 : i32
    %c0_i32_0 = arith.constant 0 : i32
    return %arg0, %c0_i32 : i32, i32
  }
  func.func @transform_1(%arg0: i32, %arg1: i32) -> (i32, i32) {
    %c0_i32 = arith.constant 0 : i32
    %c0_i32_0 = arith.constant 0 : i32
    %c0_i32_1 = arith.constant 0 : i32
    return %c0_i32, %c0_i32_0 : i32, i32
  }
  func.func @transform_2(%arg0: i32, %arg1: i32) -> (i32, i32) {
    %c0_i32 = arith.constant 0 : i32
    %c0_i32_0 = arith.constant 0 : i32
    %c0_i32_1 = arith.constant 0 : i32
    return %c0_i32, %c0_i32_0 : i32, i32
  }
  func.func @transform_3(%arg0: i32, %arg1: i32) -> (i32, i32) {
    %c0_i32 = arith.constant 0 : i32
    %c0_i32_0 = arith.constant 0 : i32
    %c0_i32_1 = arith.constant 0 : i32
    return %c0_i32, %c0_i32_0 : i32, i32
  }
  func.func @transform_4(%arg0: i32, %arg1: i32) -> (i32, i32) {
    %c0_i32 = arith.constant 0 : i32
    %c0_i32_0 = arith.constant 0 : i32
    %c0_i32_1 = arith.constant 0 : i32
    return %c0_i32, %c0_i32_0 : i32, i32
  }
  func.func @transform_5(%arg0: i32, %arg1: i32) -> (i32, i32) {
    %c0_i32 = arith.constant 0 : i32
    %c0_i32_0 = arith.constant 0 : i32
    return %c0_i32, %arg1 : i32, i32
  }
  func.func @transform_6(%arg0: i32, %arg1: i32) -> (i32, i32) {
    %c0_i32 = arith.constant 0 : i32
    %c0_i32_0 = arith.constant 0 : i32
    return %c0_i32, %arg1 : i32, i32
  }
  func.func @transform_7(%arg0: i32, %arg1: i32) -> (i32, i32) {
    %c0_i32 = arith.constant 0 : i32
    return %arg0, %arg1 : i32, i32
  }
}

</mosaic_0001>

<llo_original>
// kernel: tpu_custom_call.1
$region0: #{tpu_custom_call.1}
  #allocation0 [shape = 'u32[]', space=smem, size = 0x4, offset = 0x4, fixed_abs, tag = 'smem constant byte address 0x4 - core index']
  #allocation1 [shape = 'u32[72,128]{1,0:T(1,128)}', space=vmem, size = 0x9000, scoped, tag = 'internal scratch']
  #allocation2 [shape = 'f32[128,512]{1,0:T(8,128)}', space=vmem, size = 0x40000, scoped, tag = 'scratch operand']
  %s0 = inlined_call_operand.vmem [shape: f32[256,8], index: 0, kind: input, shape index: {}]
  %s1 = inlined_call_operand.vmem [shape: f32[8,256], index: 1, kind: input, shape index: {}]
  %s2 = inlined_call_operand.vmem [shape: f32[1,256], index: 2, kind: input, shape index: {}]
  %s3 = inlined_call_operand.hbm [shape: bf16[256,512], index: 3, kind: input, shape index: {}]
  %s4 = inlined_call_operand.vmem [shape: f32[1,512], index: 4, kind: input, shape index: {}]
  %s5 = inlined_call_operand.hbm [shape: bf16[512,256], index: 5, kind: input, shape index: {}]
  %s6 = inlined_call_operand.vmem [shape: f32[1,256], index: 6, kind: input, shape index: {}]
  %s7 = inlined_call_operand.hbm [shape: f32[256,256], index: 7, kind: output, shape index: {}]
  %s8 = sld [smem:[#allocation0]]
  $region73: #{tpu_custom_call.1} parent=0
    _
  %s10 = ssub.s32 1, %s8
  %s11 = scalar_select 0, %s10, %s8
  $region1: #{tpu_custom_call.1} parent=0
    #allocation3 [shape = 'u8[262144]{0}', space=vmem, size = 0x40000, scoped, tag = 'input window, operand 3, single buffered']
    #allocation4 [shape = 's32[2]{0}', space=sflag, size = 0x8, scoped, tag = 'scoped memory for tpu_custom_call.1']
    #allocation5 [shape = 's32[2]{0}', space=sflag, size = 0x8, scoped, tag = 'scoped memory for tpu_custom_call.1']
    #allocation6 [shape = 'u8[262144]{0}', space=vmem, size = 0x40000, scoped, tag = 'input window, operand 5, single buffered']
    #allocation7 [shape = 's32[1]{0}', space=sflag, size = 0x4, scoped, tag = 'scoped memory for tpu_custom_call.1']
    #allocation8 [shape = 'u8[262144]{0}', space=vmem, size = 0x40000, scoped, tag = 'output window, operand 0']
    %12 = vsyncpa [#allocation4], 0
    %13 = vsyncpa [#allocation7], 0
    %14 = vsyncpa [#allocation5], 0
    %s15 = scalar_lea.sflag [#allocation5], 1
    %16 = vsyncpa %s15, 0
    loop: start=0, step=1, limit=4
    $region2: #{tpu_custom_call.1} parent=1 // loop_pre_header
      _
    $region3: #{tpu_custom_call.1} parent=1 // loop_header
      %s18 = sphi 0, %s22
      %p19 = scmp.ge.s32.totalorder %s18, 4
      %s25 = sphi 0, %s37
      %s26 = sphi 0, %s33
      %s27 = sphi 0, %s25
      %s28 = sphi 0, %s26
      %s29 = sphi 0, %s27
      %s30 = sphi 0, %s28
      %s40 = sphi 0, %s42
      %s43 = sphi 0, %s40
      %s44 = sphi 0, %s43
      %s60 = sphi 0, %s44
      %s64 = sphi 0, %s64
      %s66 = sphi 0, %s64
      %s67 = sphi 0, %s66
      %s81 = sphi 0, %s67
      %s85 = sphi 0, %s85
      %s87 = sphi 0, %s85
      %s88 = sphi 0, %s87
      %s102 = sphi 0, %s88
      %s106 = sphi 0, %s106
      %s108 = sphi 0, %s106
      %s109 = sphi 0, %s108
      %s123 = sphi 0, %s109
      %s127 = sphi 0, %s127
      %s129 = sphi 0, %s127
      %s130 = sphi 0, %s129
      %s144 = sphi 0, %s130
      %s150 = sphi 0, %s152
      %s153 = sphi 0, %s150
      %s154 = sphi 0, %s153
      %s170 = sphi 0, %s154
      %s176 = sphi 0, %s178
      %s179 = sphi 0, %s176
      %s180 = sphi 0, %s179
      %s196 = sphi 0, %s180
      %s204 = sphi 0, %s206
      %s207 = sphi 0, %s204
      %s208 = sphi 0, %s207
      %s224 = sphi 0, %s208
    $region4: #{tpu_custom_call.1} parent=1 // loop_header_branch
      %21 = sbr.rel (%p19) target = $region8
    $region5: #{tpu_custom_call.1} parent=1 // loop_body
      %s23 = ssub.s32 %s18, 1
      %s24 = ssub.s32 %s18, 2
      %s31 = sadd.s32 1, %s26
      %p32 = scmp.ge.s32.totalorder %s31, 1
      %s33 = scalar_select %p32, 0, %s31
      %s34 = sadd.s32 1, %s25
      %s35 = scalar_select %p32, %s34, %s25
      %p36 = scmp.ge.s32.totalorder %s35, 2
      %s37 = scalar_select %p36, 0, %s35
      %s38 = ssub.s32 %s25, %s37
      %p39 = scmp.eq.s32.totalorder %s38, 0
      %s41 = sadd.s32 %s40, 1
      %s42 = scalar_select %p39, %s40, %s41
      %p45 = pneg %p39
      %p46 = scmp.eq.s32.totalorder %s18, 1
      %p47 = por %p45, %p46
      %p48 = scmp.ne.s32.totalorder %s40, %s43
      %p49 = scmp.eq.s32.totalorder %s18, 0
      %p50 = por %p48, %p49
      %p51 = scmp.ne.s32.totalorder %s40, %s43
      %p52 = scmp.eq.s32.totalorder %s23, 1
      %p53 = por %p51, %p52
      %p54 = scmp.ne.s32.totalorder %s43, %s44
      %p55 = scmp.eq.s32.totalorder %s23, 0
      %p56 = por %p54, %p55
      %p57 = scmp.ne.s32.totalorder %s43, %s44
      %p58 = scmp.eq.s32.totalorder %s24, 1
      %p59 = por %p57, %p58
      %p61 = scmp.ne.s32.totalorder %s44, %s60
      %p62 = scmp.eq.s32.totalorder %s24, 0
      %p63 = por %p61, %p62
      %s65 = sadd.s32 %s64, 1
      %p68 = scmp.eq.s32.totalorder %s18, 1
      %p69 = scmp.ne.s32.totalorder %s64, %s66
      %p70 = scmp.eq.s32.totalorder %s18, 0
      %p71 = por %p69, %p70
      %p72 = scmp.ne.s32.totalorder %s64, %s66
      %p73 = scmp.eq.s32.totalorder %s23, 1
      %p74 = por %p72, %p73
      %p75 = scmp.ne.s32.totalorder %s66, %s67
      %p76 = scmp.eq.s32.totalorder %s23, 0
      %p77 = por %p75, %p76
      %p78 = scmp.ne.s32.totalorder %s66, %s67
      %p79 = scmp.eq.s32.totalorder %s24, 1
      %p80 = por %p78, %p79
      %p82 = scmp.ne.s32.totalorder %s67, %s81
      %p83 = scmp.eq.s32.totalorder %s24, 0
      %p84 = por %p82, %p83
      %s86 = sadd.s32 %s85, 1
      %p89 = scmp.eq.s32.totalorder %s18, 1
      %p90 = scmp.ne.s32.totalorder %s85, %s87
      %p91 = scmp.eq.s32.totalorder %s18, 0
      %p92 = por %p90, %p91
      %p93 = scmp.ne.s32.totalorder %s85, %s87
      %p94 = scmp.eq.s32.totalorder %s23, 1
      %p95 = por %p93, %p94
      %p96 = scmp.ne.s32.totalorder %s87, %s88
      %p97 = scmp.eq.s32.totalorder %s23, 0
      %p98 = por %p96, %p97
      %p99 = scmp.ne.s32.totalorder %s87, %s88
      %p100 = scmp.eq.s32.totalorder %s24, 1
      %p101 = por %p99, %p100
      %p103 = scmp.ne.s32.totalorder %s88, %s102
      %p104 = scmp.eq.s32.totalorder %s24, 0
      %p105 = por %p103, %p104
      %s107 = sadd.s32 %s106, 1
      %p110 = scmp.eq.s32.totalorder %s18, 1
      %p111 = scmp.ne.s32.totalorder %s106, %s108
      %p112 = scmp.eq.s32.totalorder %s18, 0
      %p113 = por %p111, %p112
      %p114 = scmp.ne.s32.totalorder %s106, %s108
      %p115 = scmp.eq.s32.totalorder %s23, 1
      %p116 = por %p114, %p115
      %p117 = scmp.ne.s32.totalorder %s108, %s109
      %p118 = scmp.eq.s32.totalorder %s23, 0
      %p119 = por %p117, %p118
      %p120 = scmp.ne.s32.totalorder %s108, %s109
      %p121 = scmp.eq.s32.totalorder %s24, 1
      %p122 = por %p120, %p121
      %p124 = scmp.ne.s32.totalorder %s109, %s123
      %p125 = scmp.eq.s32.totalorder %s24, 0
      %p126 = por %p124, %p125
      %s128 = sadd.s32 %s127, 1
      %p131 = scmp.eq.s32.totalorder %s18, 1
      %p132 = scmp.ne.s32.totalorder %s127, %s129
      %p133 = scmp.eq.s32.totalorder %s18, 0
      %p134 = por %p132, %p133
      %p135 = scmp.ne.s32.totalorder %s127, %s129
      %p136 = scmp.eq.s32.totalorder %s23, 1
      %p137 = por %p135, %p136
      %p138 = scmp.ne.s32.totalorder %s129, %s130
      %p139 = scmp.eq.s32.totalorder %s23, 0
      %p140 = por %p138, %p139
      %p141 = scmp.ne.s32.totalorder %s129, %s130
      %p142 = scmp.eq.s32.totalorder %s24, 1
      %p143 = por %p141, %p142
      %p145 = scmp.ne.s32.totalorder %s130, %s144
      %p146 = scmp.eq.s32.totalorder %s24, 0
      %p147 = por %p145, %p146
      %s148 = ssub.s32 %s26, %s33
      %p149 = scmp.eq.s32.totalorder %s148, 0
      %s151 = sadd.s32 %s150, 1
      %s152 = scalar_select %p149, %s150, %s151
      %p155 = pneg %p149
      %p156 = scmp.eq.s32.totalorder %s18, 1
      %p157 = por %p155, %p156
      %p158 = scmp.ne.s32.totalorder %s150, %s153
      %p159 = scmp.eq.s32.totalorder %s18, 0
      %p160 = por %p158, %p159
      %p161 = scmp.ne.s32.totalorder %s150, %s153
      %p162 = scmp.eq.s32.totalorder %s23, 1
      %p163 = por %p161, %p162
      %p164 = scmp.ne.s32.totalorder %s153, %s154
      %p165 = scmp.eq.s32.totalorder %s23, 0
      %p166 = por %p164, %p165
      %p167 = scmp.ne.s32.totalorder %s153, %s154
      %p168 = scmp.eq.s32.totalorder %s24, 1
      %p169 = por %p167, %p168
      %p171 = scmp.ne.s32.totalorder %s154, %s170
      %p172 = scmp.eq.s32.totalorder %s24, 0
      %p173 = por %p171, %p172
      %s174 = ssub.s32 %s26, %s33
      %p175 = scmp.eq.s32.totalorder %s174, 0
      %s177 = sadd.s32 %s176, 1
      %s178 = scalar_select %p175, %s176, %s177
      %p181 = pneg %p175
      %p182 = scmp.eq.s32.totalorder %s18, 1
      %p183 = por %p181, %p182
      %p184 = scmp.ne.s32.totalorder %s176, %s179
      %p185 = scmp.eq.s32.totalorder %s18, 0
      %p186 = por %p184, %p185
      %p187 = scmp.ne.s32.totalorder %s176, %s179
      %p188 = scmp.eq.s32.totalorder %s23, 1
      %p189 = por %p187, %p188
      %p190 = scmp.ne.s32.totalorder %s179, %s180
      %p191 = scmp.eq.s32.totalorder %s23, 0
      %p192 = por %p190, %p191
      %p193 = scmp.ne.s32.totalorder %s179, %s180
      %p194 = scmp.eq.s32.totalorder %s24, 1
      %p195 = por %p193, %p194
      %p197 = scmp.ne.s32.totalorder %s180, %s196
      %p198 = scmp.eq.s32.totalorder %s24, 0
      %p199 = por %p197, %p198
      %s200 = ssub.s32 %s25, %s37
      %s201 = ssub.s32 %s26, %s33
      %s202 = sor.u32 %s200, %s201
      %p203 = scmp.eq.s32.totalorder %s202, 0
      %s205 = sadd.s32 %s204, 1
      %s206 = scalar_select %p203, %s204, %s205
      %p209 = pneg %p203
      %p210 = scmp.eq.s32.totalorder %s18, 1
      %p211 = por %p209, %p210
      %p212 = scmp.ne.s32.totalorder %s204, %s207
      %p213 = scmp.eq.s32.totalorder %s18, 0
      %p214 = por %p212, %p213
      %p215 = scmp.ne.s32.totalorder %s204, %s207
      %p216 = scmp.eq.s32.totalorder %s23, 1
      %p217 = por %p215, %p216
      %p218 = scmp.ne.s32.totalorder %s207, %s208
      %p219 = scmp.eq.s32.totalorder %s23, 0
      %p220 = por %p218, %p219
      %p221 = scmp.ne.s32.totalorder %s207, %s208
      %p222 = scmp.eq.s32.totalorder %s24, 1
      %p223 = por %p221, %p222
      %p225 = scmp.ne.s32.totalorder %s208, %s224
      %p226 = scmp.eq.s32.totalorder %s24, 0
      %p227 = por %p225, %p226
      %p228 = scmp.le.s32.totalorder 1, %s18
      %p229 = scmp.lt.s32.totalorder %s18, 3
      %p230 = pnand %p228, %p229
      %p231 = pneg %p230
      // Predicated region
      $region9: #{tpu_custom_call.1} parent=5 // pred_check
        _
      $region10: #{tpu_custom_call.1} parent=5 // pred_check_branch
        %233 = sbr.rel (%p230) target = $region12
      $region11: #{tpu_custom_call.1} parent=5 // pred_region
        %s234 = ssub.s32 %s18, 1
        // Predicated region
        $region13: #{tpu_custom_call.1} parent=11 // pred_check
          %p235 = pneg %p77
        $region14: #{tpu_custom_call.1} parent=11 // pred_check_branch
          %237 = sbr.rel (%p235) target = $region16
        $region15: #{tpu_custom_call.1} parent=11 // pred_region
          _
        $region16: #{tpu_custom_call.1} parent=11 // pred_fallthru
          _
        // Predicated region
        $region17: #{tpu_custom_call.1} parent=11 // pred_check
          %p238 = pneg %p98
        $region18: #{tpu_custom_call.1} parent=11 // pred_check_branch
          %240 = sbr.rel (%p238) target = $region20
        $region19: #{tpu_custom_call.1} parent=11 // pred_region
          _
        $region20: #{tpu_custom_call.1} parent=11 // pred_fallthru
          _
        // Predicated region
        $region21: #{tpu_custom_call.1} parent=11 // pred_check
          %p241 = pneg %p119
        $region22: #{tpu_custom_call.1} parent=11 // pred_check_branch
          %243 = sbr.rel (%p241) target = $region24
        $region23: #{tpu_custom_call.1} parent=11 // pred_region
          %245 = vsyncadd [#allocation4], 0
          %s246 = sshll.u32 %s3, 4
          %s247 = int_to_ptr.hbm [resolvable:$true] %s246
          %s248 = sshll.u32 [#allocation3], 4
          %s249 = int_to_ptr.vmem [resolvable:$true] %s248
          %254 = dma.hbm_to_vmem [thread:$0]  %s247, 8192, %s249, [#allocation4], 256, 256, 16
        $region24: #{tpu_custom_call.1} parent=11 // pred_fallthru
          _
        // Predicated region
        $region25: #{tpu_custom_call.1} parent=11 // pred_check
          %p255 = pneg %p140
        $region26: #{tpu_custom_call.1} parent=11 // pred_check_branch
          %257 = sbr.rel (%p255) target = $region28
        $region27: #{tpu_custom_call.1} parent=11 // pred_region
          _
        $region28: #{tpu_custom_call.1} parent=11 // pred_fallthru
          _
        // Predicated region
        $region29: #{tpu_custom_call.1} parent=11 // pred_check
          %p258 = pneg %p166
        $region30: #{tpu_custom_call.1} parent=11 // pred_check_branch
          %260 = sbr.rel (%p258) target = $region32
        $region31: #{tpu_custom_call.1} parent=11 // pred_region
          %s261 = smul.u32 2, %s28
          %263 = vsyncadd [#allocation7], 0
          %s264 = smul.addr %s261, 4
          %s265 = scalar_lea.hbm %s5, %s264
          %s266 = sshll.u32 %s265, 4
          %s267 = int_to_ptr.hbm [resolvable:$true] %s266
          %s268 = sshll.u32 [#allocation6], 4
          %s269 = int_to_ptr.vmem [resolvable:$true] %s268
          %274 = dma.hbm_to_vmem [thread:$0]  %s267, 8192, %s269, [#allocation7], 128, 128, 8
        $region32: #{tpu_custom_call.1} parent=11 // pred_fallthru
          _
        // Predicated region
        $region33: #{tpu_custom_call.1} parent=11 // pred_check
          %p275 = pneg %p192
        $region34: #{tpu_custom_call.1} parent=11 // pred_check_branch
          %277 = sbr.rel (%p275) target = $region36
        $region35: #{tpu_custom_call.1} parent=11 // pred_region
          %s278 = smul.u32 2, %s28
          %p279 = scmp.lt.s32.totalorder %s278, 1
          %s280 = scalar_select %p279, %s278, 1
          %s281 = scalar_lea.vmem %s6, %s280
          %s282 = smul.u32 2, %s28
        $region36: #{tpu_custom_call.1} parent=11 // pred_fallthru
          _
      $region12: #{tpu_custom_call.1} parent=5 // pred_fallthru
        _
      %p283 = scmp.lt.s32.totalorder %s18, 2
      // Predicated region
      $region37: #{tpu_custom_call.1} parent=5 // pred_check
        %p284 = pneg %p283
      $region38: #{tpu_custom_call.1} parent=5 // pred_check_branch
        %286 = sbr.rel (%p284) target = $region40
      $region39: #{tpu_custom_call.1} parent=5 // pred_region
        // Predicated region
        $region41: #{tpu_custom_call.1} parent=39 // pred_check
          %p287 = pneg %p50
        $region42: #{tpu_custom_call.1} parent=39 // pred_check_branch
          %289 = sbr.rel (%p287) target = $region44
        $region43: #{tpu_custom_call.1} parent=39 // pred_region
          %s290 = smul.u32 16, %s25
          %p291 = scmp.lt.s32.totalorder %s290, 31
          %s292 = scalar_select %p291, %s290, 31
          %s293 = smul.addr %s292, 8
          %s294 = scalar_lea.vmem %s0, %s293
          %s295 = smul.u32 16, %s25
        $region44: #{tpu_custom_call.1} parent=39 // pred_fallthru
          _
      $region40: #{tpu_custom_call.1} parent=5 // pred_fallthru
        _
      %p296 = scmp.le.s32.totalorder 1, %s18
      %p297 = scmp.lt.s32.totalorder %s18, 3
      %p298 = pnand %p296, %p297
      %p299 = pneg %p298
      // Predicated region
      $region45: #{tpu_custom_call.1} parent=5 // pred_check
        _
      $region46: #{tpu_custom_call.1} parent=5 // pred_check_branch
        %301 = sbr.rel (%p298) target = $region48
      $region47: #{tpu_custom_call.1} parent=5 // pred_region
        %s302 = ssub.s32 %s18, 1
        // Predicated region
        $region49: #{tpu_custom_call.1} parent=47 // pred_check
          %p303 = pneg %p119
        $region50: #{tpu_custom_call.1} parent=47 // pred_check_branch
          %305 = sbr.rel (%p303) target = $region52
        $region51: #{tpu_custom_call.1} parent=47 // pred_region
          %307 = dma.done [#allocation4], 8192
        $region52: #{tpu_custom_call.1} parent=47 // pred_fallthru
          _
        // Predicated region
        $region53: #{tpu_custom_call.1} parent=47 // pred_check
          %p308 = pneg %p166
        $region54: #{tpu_custom_call.1} parent=47 // pred_check_branch
          %310 = sbr.rel (%p308) target = $region56
        $region55: #{tpu_custom_call.1} parent=47 // pred_region
          %312 = dma.done [#allocation7], 8192
        $region56: #{tpu_custom_call.1} parent=47 // pred_fallthru
          _
        %s313 = smul.u32 16, %s27
        %p314 = scmp.lt.s32.totalorder %s313, 31
        %s315 = scalar_select %p314, %s313, 31
        %s316 = smul.addr %s315, 8
        %s317 = scalar_lea.vmem %s0, %s316
        %p318 = pneg %p56
        %p319 = pneg %p53
        %p320 = pneg %p77
        %p321 = pneg %p74
        %p322 = pneg %p98
        %p323 = pneg %p95
        %p324 = pneg %p119
        %p325 = pneg %p116
        %p326 = pneg %p140
        %p327 = pneg %p137
        %p328 = pneg %p166
        %p329 = pneg %p163
        %s330 = smul.u32 2, %s28
        %p331 = scmp.lt.s32.totalorder %s330, 1
        %s332 = scalar_select %p331, %s330, 1
        %s333 = scalar_lea.vmem %s6, %s332
        %p334 = pneg %p192
        %p335 = pneg %p189
        %p336 = pneg %p220
        %p337 = pneg %p217
        %s338 = sand.u32 %s207, 1
        %s339 = scalar_lea.sflag [#allocation5], %s338
        %s340 = sand.u32 %s207, 1
        %s341 = smul.addr %s340, 256
        %s342 = scalar_lea.vmem [#allocation8], %s341
        %s343 = smul.u32 16, %s27
        %p344 = scmp.lt.s32.totalorder %s343, 31
        %s345 = scalar_select %p344, %s343, 31
        %s346 = smul.addr %s345, 8
        %s347 = scalar_lea.vmem %s0, %s346
        %s348 = smul.u32 16, %s27
        %s349 = smul.u32 2, %s28
        %s350 = smul.u32 2, %s28
        %p351 = scmp.lt.s32.totalorder %s350, 1
        %s352 = scalar_select %p351, %s350, 1
        %s353 = scalar_lea.vmem %s6, %s352
        %s354 = smul.u32 2, %s28
        %s355 = smul.u32 16, %s27
        %s356 = smul.u32 2, %s28
        %p357 = scmp.eq.s32.totalorder %s28, 0
        // Predicated region
        $region57: #{tpu_custom_call.1} parent=47 // pred_check
          %p358 = pneg %p357
        $region58: #{tpu_custom_call.1} parent=47 // pred_check_branch
          %360 = sbr.rel (%p358) target = $region60
        $region59: #{tpu_custom_call.1} parent=47 // pred_region
          %v361 = vld [vmem:[%s347] sm:$0xff]
          %v362 = vld [vmem:[%s347 + $0x8] sm:$0xff]
          %v363 = vld [vmem:[%s347 + $0x10] sm:$0xff]
          %v364 = vld [vmem:[%s347 + $0x18] sm:$0xff]
          %v365 = vld [vmem:[%s347 + $0x20] sm:$0xff]
          %v366 = vld [vmem:[%s347 + $0x28] sm:$0xff]
          %v367 = vld [vmem:[%s347 + $0x30] sm:$0xff]
          %v368 = vld [vmem:[%s347 + $0x38] sm:$0xff]
          %v369 = vld [vmem:[%s347 + $0x40] sm:$0xff]
          %v370 = vld [vmem:[%s347 + $0x48] sm:$0xff]
          %v371 = vld [vmem:[%s347 + $0x50] sm:$0xff]
          %v372 = vld [vmem:[%s347 + $0x58] sm:$0xff]
          %v373 = vld [vmem:[%s347 + $0x60] sm:$0xff]
          %v374 = vld [vmem:[%s347 + $0x68] sm:$0xff]
          %v375 = vld [vmem:[%s347 + $0x70] sm:$0xff]
          %v376 = vld [vmem:[%s347 + $0x78] sm:$0xff]
          %v377 = vld [vmem:[%s1] sm:$0xff]
          %v378 = vld [vmem:[%s1 + $0x8] sm:$0xff]
          %v379 = vld [vmem:[%s2] sm:$0x3]
          %v381 = vperm.slane %v379, 0
          %v382 = vperm.slane %v379, 1
          %vm385 = vcmask 64512
          %v387 = vsel %vm385, %v361, 0
          %v390 = vsel %vm385, %v362, 0
          %v393 = vsel %vm385, %v363, 0
          %v396 = vsel %vm385, %v364, 0
          %v399 = vsel %vm385, %v365, 0
          %v402 = vsel %vm385, %v366, 0
          %v405 = vsel %vm385, %v367, 0
          %v408 = vsel %vm385, %v368, 0
          %v411 = vsel %vm385, %v369, 0
          %v414 = vsel %vm385, %v370, 0
          %v417 = vsel %vm385, %v371, 0
          %v420 = vsel %vm385, %v372, 0
          %v423 = vsel %vm385, %v373, 0
          %v426 = vsel %vm385, %v374, 0
          %v429 = vsel %vm385, %v375, 0
          %v432 = vsel %vm385, %v376, 0
          %434 = vmatpush.msra.mxu0 0.0
          %435 = vmatpush.msra.mxu0 0.0
          %436 = vmatpush.msra.mxu0 0.0
          %437 = vmatpush.msra.mxu0 0.0
          %438 = vmatpush.msra.mxu0 0.0
          %439 = vmatpush.msra.mxu0 0.0
          %440 = vmatpush.msra.mxu0 0.0
          %441 = vmatpush.msra.mxu0 0.0
          %442 = vmatpush.msra.mxu0 0.0
          %443 = vmatpush.msra.mxu0 0.0
          %444 = vmatpush.msra.mxu0 0.0
          %445 = vmatpush.msra.mxu0 0.0
          %446 = vmatpush.msra.mxu0 0.0
          %447 = vmatpush.msra.mxu0 0.0
          %448 = vmatpush.msra.mxu0 0.0
          %449 = vmatpush.msra.mxu0 %v377
          %450 = vmatmul.f32.gmra.mxu0 %v387
          %v451 = vpop.f32.mrf.mxu0
          %v452 = vadd.f32 %v381, %v451
          %453 = vmatmul.f32.gmra.mxu0 %v390
          %v454 = vpop.f32.mrf.mxu0
          %v455 = vadd.f32 %v381, %v454
          %456 = vmatmul.f32.gmra.mxu0 %v393
          %v457 = vpop.f32.mrf.mxu0
          %v458 = vadd.f32 %v381, %v457
          %459 = vmatmul.f32.gmra.mxu0 %v396
          %v460 = vpop.f32.mrf.mxu0
          %v461 = vadd.f32 %v381, %v460
          %462 = vmatmul.f32.gmra.mxu0 %v399
          %v463 = vpop.f32.mrf.mxu0
          %v464 = vadd.f32 %v381, %v463
          %465 = vmatmul.f32.gmra.mxu0 %v402
          %v466 = vpop.f32.mrf.mxu0
          %v467 = vadd.f32 %v381, %v466
          %468 = vmatmul.f32.gmra.mxu0 %v405
          %v469 = vpop.f32.mrf.mxu0
          %v470 = vadd.f32 %v381, %v469
          %471 = vmatmul.f32.gmra.mxu0 %v408
          %v472 = vpop.f32.mrf.mxu0
          %v473 = vadd.f32 %v381, %v472
          %474 = vmatmul.f32.gmra.mxu0 %v411
          %v475 = vpop.f32.mrf.mxu0
          %v476 = vadd.f32 %v381, %v475
          %477 = vmatmul.f32.gmra.mxu0 %v414
          %v478 = vpop.f32.mrf.mxu0
          %v479 = vadd.f32 %v381, %v478
          %480 = vmatmul.f32.gmra.mxu0 %v417
          %v481 = vpop.f32.mrf.mxu0
          %v482 = vadd.f32 %v381, %v481
          %483 = vmatmul.f32.gmra.mxu0 %v420
          %v484 = vpop.f32.mrf.mxu0
          %v485 = vadd.f32 %v381, %v484
          %486 = vmatmul.f32.gmra.mxu0 %v423
          %v487 = vpop.f32.mrf.mxu0
          %v488 = vadd.f32 %v381, %v487
          %489 = vmatmul.f32.gmra.mxu0 %v426
          %v490 = vpop.f32.mrf.mxu0
          %v491 = vadd.f32 %v381, %v490
          %492 = vmatmul.f32.gmra.mxu0 %v429
          %v493 = vpop.f32.mrf.mxu0
          %v494 = vadd.f32 %v381, %v493
          %495 = vmatmul.f32.gmra.mxu0 %v432
          %v496 = vpop.f32.mrf.mxu0
          %v497 = vadd.f32 %v381, %v496
          %498 = vdwg.mxu0
          %499 = vmatpush.msra.mxu0 0.0
          %500 = vmatpush.msra.mxu0 0.0
          %501 = vmatpush.msra.mxu0 0.0
          %502 = vmatpush.msra.mxu0 0.0
          %503 = vmatpush.msra.mxu0 0.0
          %504 = vmatpush.msra.mxu0 0.0
          %505 = vmatpush.msra.mxu0 0.0
          %506 = vmatpush.msra.mxu0 0.0
          %507 = vmatpush.msra.mxu0 0.0
          %508 = vmatpush.msra.mxu0 0.0
          %509 = vmatpush.msra.mxu0 0.0
          %510 = vmatpush.msra.mxu0 0.0
          %511 = vmatpush.msra.mxu0 0.0
          %512 = vmatpush.msra.mxu0 0.0
          %513 = vmatpush.msra.mxu0 0.0
          %514 = vmatpush.msra.mxu0 %v378
          %515 = vmatmul.f32.gmra.mxu0 %v387
          %v516 = vpop.f32.mrf.mxu0
          %v517 = vadd.f32 %v382, %v516
          %518 = vmatmul.f32.gmra.mxu0 %v390
          %v519 = vpop.f32.mrf.mxu0
          %v520 = vadd.f32 %v382, %v519
          %521 = vmatmul.f32.gmra.mxu0 %v393
          %v522 = vpop.f32.mrf.mxu0
          %v523 = vadd.f32 %v382, %v522
          %524 = vmatmul.f32.gmra.mxu0 %v396
          %v525 = vpop.f32.mrf.mxu0
          %v526 = vadd.f32 %v382, %v525
          %527 = vmatmul.f32.gmra.mxu0 %v399
          %v528 = vpop.f32.mrf.mxu0
          %v529 = vadd.f32 %v382, %v528
          %530 = vmatmul.f32.gmra.mxu0 %v402
          %v531 = vpop.f32.mrf.mxu0
          %v532 = vadd.f32 %v382, %v531
          %533 = vmatmul.f32.gmra.mxu0 %v405
          %v534 = vpop.f32.mrf.mxu0
          %v535 = vadd.f32 %v382, %v534
          %536 = vmatmul.f32.gmra.mxu0 %v408
          %v537 = vpop.f32.mrf.mxu0
          %v538 = vadd.f32 %v382, %v537
          %539 = vmatmul.f32.gmra.mxu0 %v411
          %v540 = vpop.f32.mrf.mxu0
          %v541 = vadd.f32 %v382, %v540
          %542 = vmatmul.f32.gmra.mxu0 %v414
          %v543 = vpop.f32.mrf.mxu0
          %v544 = vadd.f32 %v382, %v543
          %545 = vmatmul.f32.gmra.mxu0 %v417
          %v546 = vpop.f32.mrf.mxu0
          %v547 = vadd.f32 %v382, %v546
          %548 = vmatmul.f32.gmra.mxu0 %v420
          %v549 = vpop.f32.mrf.mxu0
          %v550 = vadd.f32 %v382, %v549
          %551 = vmatmul.f32.gmra.mxu0 %v423
          %v552 = vpop.f32.mrf.mxu0
          %v553 = vadd.f32 %v382, %v552
          %554 = vmatmul.f32.gmra.mxu0 %v426
          %v555 = vpop.f32.mrf.mxu0
          %v556 = vadd.f32 %v382, %v555
          %557 = vmatmul.f32.gmra.mxu0 %v429
          %v558 = vpop.f32.mrf.mxu0
          %v559 = vadd.f32 %v382, %v558
          %560 = vmatmul.f32.gmra.mxu0 %v432
          %v561 = vpop.f32.mrf.mxu0
          %v562 = vadd.f32 %v382, %v561
          %563 = vdwg.mxu0
          %v564 = vmax.f32 %v452, 0.0
          %v565 = vmax.f32 %v517, 0.0
          %v566 = vmax.f32 %v455, 0.0
          %v567 = vmax.f32 %v520, 0.0
          %v568 = vmax.f32 %v458, 0.0
          %v569 = vmax.f32 %v523, 0.0
          %v570 = vmax.f32 %v461, 0.0
          %v571 = vmax.f32 %v526, 0.0
          %v572 = vmax.f32 %v464, 0.0
          %v573 = vmax.f32 %v529, 0.0
          %v574 = vmax.f32 %v467, 0.0
          %v575 = vmax.f32 %v532, 0.0
          %v576 = vmax.f32 %v470, 0.0
          %v577 = vmax.f32 %v535, 0.0
          %v578 = vmax.f32 %v473, 0.0
          %v579 = vmax.f32 %v538, 0.0
          %v580 = vmax.f32 %v476, 0.0
          %v581 = vmax.f32 %v541, 0.0
          %v582 = vmax.f32 %v479, 0.0
          %v583 = vmax.f32 %v544, 0.0
          %v584 = vmax.f32 %v482, 0.0
          %v585 = vmax.f32 %v547, 0.0
          %v586 = vmax.f32 %v485, 0.0
          %v587 = vmax.f32 %v550, 0.0
          %v588 = vmax.f32 %v488, 0.0
          %v589 = vmax.f32 %v553, 0.0
          %v590 = vmax.f32 %v491, 0.0
          %v591 = vmax.f32 %v556, 0.0
          %v592 = vmax.f32 %v494, 0.0
          %v593 = vmax.f32 %v559, 0.0
          %v594 = vmax.f32 %v497, 0.0
          %v595 = vmax.f32 %v562, 0.0
          %v596 = vpack.c.bf16 %v566, %v564
          %v597 = vpack.c.bf16 %v567, %v565
          %v598 = vpack.c.bf16 %v570, %v568
          %v599 = vpack.c.bf16 %v571, %v569
          %v600 = vpack.c.bf16 %v574, %v572
          %v601 = vpack.c.bf16 %v575, %v573
          %v602 = vpack.c.bf16 %v578, %v576
          %v603 = vpack.c.bf16 %v579, %v577
          %v604 = vpack.c.bf16 %v582, %v580
          %v605 = vpack.c.bf16 %v583, %v581
          %v606 = vpack.c.bf16 %v586, %v584
          %v607 = vpack.c.bf16 %v587, %v585
          %v608 = vpack.c.bf16 %v590, %v588
          %v609 = vpack.c.bf16 %v591, %v589
          %v610 = vpack.c.bf16 %v594, %v592
          %v611 = vpack.c.bf16 %v595, %v593
          %v612 = vld [vmem:[#allocation3] sm:$0xff]
          %v613 = vld [vmem:[#allocation3 + $0x8] sm:$0xff]
          %v614 = vld [vmem:[#allocation3 + $0x10] sm:$0xff]
          %v615 = vld [vmem:[#allocation3 + $0x18] sm:$0xff]
          %v616 = vld [vmem:[#allocation3 + $0x20] sm:$0xff]
          %v617 = vld [vmem:[#allocation3 + $0x28] sm:$0xff]
          %v618 = vld [vmem:[#allocation3 + $0x30] sm:$0xff]
          %v619 = vld [vmem:[#allocation3 + $0x38] sm:$0xff]
          %v620 = vld [vmem:[#allocation3 + $0x40] sm:$0xff]
          %v621 = vld [vmem:[#allocation3 + $0x48] sm:$0xff]
          %v622 = vld [vmem:[#allocation3 + $0x50] sm:$0xff]
          %v623 = vld [vmem:[#allocation3 + $0x58] sm:$0xff]
          %v624 = vld [vmem:[#allocation3 + $0x60] sm:$0xff]
          %v625 = vld [vmem:[#allocation3 + $0x68] sm:$0xff]
          %v626 = vld [vmem:[#allocation3 + $0x70] sm:$0xff]
          %v627 = vld [vmem:[#allocation3 + $0x78] sm:$0xff]
          %v628 = vld [vmem:[#allocation3 + $0x80] sm:$0xff]
          %v629 = vld [vmem:[#allocation3 + $0x88] sm:$0xff]
          %v630 = vld [vmem:[#allocation3 + $0x90] sm:$0xff]
          %v631 = vld [vmem:[#allocation3 + $0x98] sm:$0xff]
          %v632 = vld [vmem:[#allocation3 + $0xa0] sm:$0xff]
          %v633 = vld [vmem:[#allocation3 + $0xa8] sm:$0xff]
          %v634 = vld [vmem:[#allocation3 + $0xb0] sm:$0xff]
          %v635 = vld [vmem:[#allocation3 + $0xb8] sm:$0xff]
          %v636 = vld [vmem:[#allocation3 + $0xc0] sm:$0xff]
          %v637 = vld [vmem:[#allocation3 + $0xc8] sm:$0xff]
          %v638 = vld [vmem:[#allocation3 + $0xd0] sm:$0xff]
          %v639 = vld [vmem:[#allocation3 + $0xd8] sm:$0xff]
          %v640 = vld [vmem:[#allocation3 + $0xe0] sm:$0xff]
          %v641 = vld [vmem:[#allocation3 + $0xe8] sm:$0xff]
          %v642 = vld [vmem:[#allocation3 + $0xf0] sm:$0xff]
          %v643 = vld [vmem:[#allocation3 + $0xf8] sm:$0xff]
          %v644 = vld [vmem:[#allocation3 + $0x100] sm:$0xff]
          %v645 = vld [vmem:[#allocation3 + $0x108] sm:$0xff]
          %v646 = vld [vmem:[#allocation3 + $0x110] sm:$0xff]
          %v647 = vld [vmem:[#allocation3 + $0x118] sm:$0xff]
          %v648 = vld [vmem:[#allocation3 + $0x120] sm:$0xff]
          %v649 = vld [vmem:[#allocation3 + $0x128] sm:$0xff]
          %v650 = vld [vmem:[#allocation3 + $0x130] sm:$0xff]
          %v651 = vld [vmem:[#allocation3 + $0x138] sm:$0xff]
          %v652 = vld [vmem:[#allocation3 + $0x140] sm:$0xff]
          %v653 = vld [vmem:[#allocation3 + $0x148] sm:$0xff]
          %v654 = vld [vmem:[#allocation3 + $0x150] sm:$0xff]
          %v655 = vld [vmem:[#allocation3 + $0x158] sm:$0xff]
          %v656 = vld [vmem:[#allocation3 + $0x160] sm:$0xff]
          %v657 = vld [vmem:[#allocation3 + $0x168] sm:$0xff]
          %v658 = vld [vmem:[#allocation3 + $0x170] sm:$0xff]
          %v659 = vld [vmem:[#allocation3 + $0x178] sm:$0xff]
          %v660 = vld [vmem:[#allocation3 + $0x180] sm:$0xff]
          %v661 = vld [vmem:[#allocation3 + $0x188] sm:$0xff]
          %v662 = vld [vmem:[#allocation3 + $0x190] sm:$0xff]
          %v663 = vld [vmem:[#allocation3 + $0x198] sm:$0xff]
          %v664 = vld [vmem:[#allocation3 + $0x1a0] sm:$0xff]
          %v665 = vld [vmem:[#allocation3 + $0x1a8] sm:$0xff]
          %v666 = vld [vmem:[#allocation3 + $0x1b0] sm:$0xff]
          %v667 = vld [vmem:[#allocation3 + $0x1b8] sm:$0xff]
          %v668 = vld [vmem:[#allocation3 + $0x1c0] sm:$0xff]
          %v669 = vld [vmem:[#allocation3 + $0x1c8] sm:$0xff]
          %v670 = vld [vmem:[#allocation3 + $0x1d0] sm:$0xff]
          %v671 = vld [vmem:[#allocation3 + $0x1d8] sm:$0xff]
          %v672 = vld [vmem:[#allocation3 + $0x1e0] sm:$0xff]
          %v673 = vld [vmem:[#allocation3 + $0x1e8] sm:$0xff]
          %v674 = vld [vmem:[#allocation3 + $0x1f0] sm:$0xff]
          %v675 = vld [vmem:[#allocation3 + $0x1f8] sm:$0xff]
          %v676 = vld [vmem:[%s4] sm:$0xf]
          %v678 = vperm.slane %v676, 0
          %v679 = vperm.slane %v676, 1
          %v680 = vperm.slane %v676, 2
          %v681 = vperm.slane %v676, 3
          %v750 = vunpack.c.l.b16 %v612
          %v751 = vunpack.c.h.b16 %v612
          %v752 = vunpack.c.l.b16 %v613
          %v753 = vunpack.c.h.b16 %v613
          %v754 = vunpack.c.l.b16 %v614
          %v755 = vunpack.c.h.b16 %v614
          %v756 = vunpack.c.l.b16 %v615
          %v757 = vunpack.c.h.b16 %v615
          %v758 = vunpack.c.l.b16 %v616
          %v759 = vunpack.c.h.b16 %v616
          %v760 = vunpack.c.l.b16 %v617
          %v761 = vunpack.c.h.b16 %v617
          %v762 = vunpack.c.l.b16 %v618
          %v763 = vunpack.c.h.b16 %v618
          %v764 = vunpack.c.l.b16 %v619
          %v765 = vunpack.c.h.b16 %v619
          %v766 = vunpack.c.l.b16 %v620
          %v767 = vunpack.c.h.b16 %v620
          %v768 = vunpack.c.l.b16 %v621
          %v769 = vunpack.c.h.b16 %v621
          %v770 = vunpack.c.l.b16 %v622
          %v771 = vunpack.c.h.b16 %v622
          %v772 = vunpack.c.l.b16 %v623
          %v773 = vunpack.c.h.b16 %v623
          %v774 = vunpack.c.l.b16 %v624
          %v775 = vunpack.c.h.b16 %v624
          %v776 = vunpack.c.l.b16 %v625
          %v777 = vunpack.c.h.b16 %v625
          %v778 = vunpack.c.l.b16 %v626
          %v779 = vunpack.c.h.b16 %v626
          %v780 = vunpack.c.l.b16 %v627
          %v781 = vunpack.c.h.b16 %v627
          %v782 = vunpack.c.l.b16 %v628
          %v783 = vunpack.c.h.b16 %v628
          %v784 = vunpack.c.l.b16 %v629
          %v785 = vunpack.c.h.b16 %v629
          %v786 = vunpack.c.l.b16 %v630
          %v787 = vunpack.c.h.b16 %v630
          %v788 = vunpack.c.l.b16 %v631
          %v789 = vunpack.c.h.b16 %v631
          %v790 = vunpack.c.l.b16 %v632
          %v791 = vunpack.c.h.b16 %v632
          %v792 = vunpack.c.l.b16 %v633
          %v793 = vunpack.c.h.b16 %v633
          %v794 = vunpack.c.l.b16 %v634
          %v795 = vunpack.c.h.b16 %v634
          %v796 = vunpack.c.l.b16 %v635
          %v797 = vunpack.c.h.b16 %v635
          %v798 = vunpack.c.l.b16 %v636
          %v799 = vunpack.c.h.b16 %v636
          %v800 = vunpack.c.l.b16 %v637
          %v801 = vunpack.c.h.b16 %v637
          %v802 = vunpack.c.l.b16 %v638
          %v803 = vunpack.c.h.b16 %v638
          %v804 = vunpack.c.l.b16 %v639
          %v805 = vunpack.c.h.b16 %v639
          %v806 = vunpack.c.l.b16 %v640
          %v807 = vunpack.c.h.b16 %v640
          %v808 = vunpack.c.l.b16 %v641
          %v809 = vunpack.c.h.b16 %v641
          %v810 = vunpack.c.l.b16 %v642
          %v811 = vunpack.c.h.b16 %v642
          %v812 = vunpack.c.l.b16 %v643
          %v813 = vunpack.c.h.b16 %v643
          %v814 = vunpack.c.l.b16 %v644
          %v815 = vunpack.c.h.b16 %v644
          %v816 = vunpack.c.l.b16 %v645
          %v817 = vunpack.c.h.b16 %v645
          %v818 = vunpack.c.l.b16 %v646
          %v819 = vunpack.c.h.b16 %v646
          %v820 = vunpack.c.l.b16 %v647
          %v821 = vunpack.c.h.b16 %v647
          %v822 = vunpack.c.l.b16 %v648
          %v823 = vunpack.c.h.b16 %v648
          %v824 = vunpack.c.l.b16 %v649
          %v825 = vunpack.c.h.b16 %v649
          %v826 = vunpack.c.l.b16 %v650
          %v827 = vunpack.c.h.b16 %v650
          %v828 = vunpack.c.l.b16 %v651
          %v829 = vunpack.c.h.b16 %v651
          %v830 = vunpack.c.l.b16 %v652
          %v831 = vunpack.c.h.b16 %v652
          %v832 = vunpack.c.l.b16 %v653
          %v833 = vunpack.c.h.b16 %v653
          %v834 = vunpack.c.l.b16 %v654
          %v835 = vunpack.c.h.b16 %v654
          %v836 = vunpack.c.l.b16 %v655
          %v837 = vunpack.c.h.b16 %v655
          %v838 = vunpack.c.l.b16 %v656
          %v839 = vunpack.c.h.b16 %v656
          %v840 = vunpack.c.l.b16 %v657
          %v841 = vunpack.c.h.b16 %v657
          %v842 = vunpack.c.l.b16 %v658
          %v843 = vunpack.c.h.b16 %v658
          %v844 = vunpack.c.l.b16 %v659
          %v845 = vunpack.c.h.b16 %v659
          %v846 = vunpack.c.l.b16 %v660
          %v847 = vunpack.c.h.b16 %v660
          %v848 = vunpack.c.l.b16 %v661
          %v849 = vunpack.c.h.b16 %v661
          %v850 = vunpack.c.l.b16 %v662
          %v851 = vunpack.c.h.b16 %v662
          %v852 = vunpack.c.l.b16 %v663
          %v853 = vunpack.c.h.b16 %v663
          %v854 = vunpack.c.l.b16 %v664
          %v855 = vunpack.c.h.b16 %v664
          %v856 = vunpack.c.l.b16 %v665
          %v857 = vunpack.c.h.b16 %v665
          %v858 = vunpack.c.l.b16 %v666
          %v859 = vunpack.c.h.b16 %v666
          %v860 = vunpack.c.l.b16 %v667
          %v861 = vunpack.c.h.b16 %v667
          %v862 = vunpack.c.l.b16 %v668
          %v863 = vunpack.c.h.b16 %v668
          %v864 = vunpack.c.l.b16 %v669
          %v865 = vunpack.c.h.b16 %v669
          %v866 = vunpack.c.l.b16 %v670
          %v867 = vunpack.c.h.b16 %v670
          %v868 = vunpack.c.l.b16 %v671
          %v869 = vunpack.c.h.b16 %v671
          %v870 = vunpack.c.l.b16 %v672
          %v871 = vunpack.c.h.b16 %v672
          %v872 = vunpack.c.l.b16 %v673
          %v873 = vunpack.c.h.b16 %v673
          %v874 = vunpack.c.l.b16 %v674
          %v875 = vunpack.c.h.b16 %v674
          %v876 = vunpack.c.l.b16 %v675
          %v877 = vunpack.c.h.b16 %v675
          %v878 = vpack.c.b16 %v754, %v750
          %v879 = vpack.c.b16 %v755, %v751
          %v880 = vpack.c.b16 %v756, %v752
          %v881 = vpack.c.b16 %v757, %v753
          %v882 = vpack.c.b16 %v762, %v758
          %v883 = vpack.c.b16 %v763, %v759
          %v884 = vpack.c.b16 %v764, %v760
          %v885 = vpack.c.b16 %v765, %v761
          %v886 = vpack.c.b16 %v770, %v766
          %v887 = vpack.c.b16 %v771, %v767
          %v888 = vpack.c.b16 %v772, %v768
          %v889 = vpack.c.b16 %v773, %v769
          %v890 = vpack.c.b16 %v778, %v774
          %v891 = vpack.c.b16 %v779, %v775
          %v892 = vpack.c.b16 %v780, %v776
          %v893 = vpack.c.b16 %v781, %v777
          %v894 = vpack.c.b16 %v786, %v782
          %v895 = vpack.c.b16 %v787, %v783
          %v896 = vpack.c.b16 %v788, %v784
          %v897 = vpack.c.b16 %v789, %v785
          %v898 = vpack.c.b16 %v794, %v790
          %v899 = vpack.c.b16 %v795, %v791
          %v900 = vpack.c.b16 %v796, %v792
          %v901 = vpack.c.b16 %v797, %v793
          %v902 = vpack.c.b16 %v802, %v798
          %v903 = vpack.c.b16 %v803, %v799
          %v904 = vpack.c.b16 %v804, %v800
          %v905 = vpack.c.b16 %v805, %v801
          %v906 = vpack.c.b16 %v810, %v806
          %v907 = vpack.c.b16 %v811, %v807
          %v908 = vpack.c.b16 %v812, %v808
          %v909 = vpack.c.b16 %v813, %v809
          %v910 = vpack.c.b16 %v818, %v814
          %v911 = vpack.c.b16 %v819, %v815
          %v912 = vpack.c.b16 %v820, %v816
          %v913 = vpack.c.b16 %v821, %v817
          %v914 = vpack.c.b16 %v826, %v822
          %v915 = vpack.c.b16 %v827, %v823
          %v916 = vpack.c.b16 %v828, %v824
          %v917 = vpack.c.b16 %v829, %v825
          %v918 = vpack.c.b16 %v834, %v830
          %v919 = vpack.c.b16 %v835, %v831
          %v920 = vpack.c.b16 %v836, %v832
          %v921 = vpack.c.b16 %v837, %v833
          %v922 = vpack.c.b16 %v842, %v838
          %v923 = vpack.c.b16 %v843, %v839
          %v924 = vpack.c.b16 %v844, %v840
          %v925 = vpack.c.b16 %v845, %v841
          %v926 = vpack.c.b16 %v850, %v846
          %v927 = vpack.c.b16 %v851, %v847
          %v928 = vpack.c.b16 %v852, %v848
          %v929 = vpack.c.b16 %v853, %v849
          %v930 = vpack.c.b16 %v858, %v854
          %v931 = vpack.c.b16 %v859, %v855
          %v932 = vpack.c.b16 %v860, %v856
          %v933 = vpack.c.b16 %v861, %v857
          %v934 = vpack.c.b16 %v866, %v862
          %v935 = vpack.c.b16 %v867, %v863
          %v936 = vpack.c.b16 %v868, %v864
          %v937 = vpack.c.b16 %v869, %v865
          %v938 = vpack.c.b16 %v874, %v870
          %v939 = vpack.c.b16 %v875, %v871
          %v940 = vpack.c.b16 %v876, %v872
          %v941 = vpack.c.b16 %v877, %v873
          %1006 = vmatpush.bf16.msra.mxu0 %v906
          %1007 = vmatpush.bf16.msra.mxu0 %v902
          %1008 = vmatpush.bf16.msra.mxu0 %v898
          %1009 = vmatpush.bf16.msra.mxu0 %v894
          %1010 = vmatpush.bf16.msra.mxu0 %v890
          %1011 = vmatpush.bf16.msra.mxu0 %v886
          %1012 = vmatpush.bf16.msra.mxu0 %v882
          %1013 = vmatpush.bf16.msra.mxu0 %v878
          %1014 = vmatmul.bf16.gmra.mxu0 %v596
          %v1015 = vpop.f32.mrf.mxu0
          %v1016 = vadd.f32 %v678, %v1015
          %v1017 = vpop.f32.mrf.mxu0
          %v1018 = vadd.f32 %v678, %v1017
          %1019 = vmatmul.bf16.gmra.mxu0 %v598
          %v1020 = vpop.f32.mrf.mxu0
          %v1021 = vadd.f32 %v678, %v1020
          %v1022 = vpop.f32.mrf.mxu0
          %v1023 = vadd.f32 %v678, %v1022
          %1024 = vmatmul.bf16.gmra.mxu0 %v600
          %v1025 = vpop.f32.mrf.mxu0
          %v1026 = vadd.f32 %v678, %v1025
          %v1027 = vpop.f32.mrf.mxu0
          %v1028 = vadd.f32 %v678, %v1027
          %1029 = vmatmul.bf16.gmra.mxu0 %v602
          %v1030 = vpop.f32.mrf.mxu0
          %v1031 = vadd.f32 %v678, %v1030
          %v1032 = vpop.f32.mrf.mxu0
          %v1033 = vadd.f32 %v678, %v1032
          %1034 = vmatmul.bf16.gmra.mxu0 %v604
          %v1035 = vpop.f32.mrf.mxu0
          %v1036 = vadd.f32 %v678, %v1035
          %v1037 = vpop.f32.mrf.mxu0
          %v1038 = vadd.f32 %v678, %v1037
          %1039 = vmatmul.bf16.gmra.mxu0 %v606
          %v1040 = vpop.f32.mrf.mxu0
          %v1041 = vadd.f32 %v678, %v1040
          %v1042 = vpop.f32.mrf.mxu0
          %v1043 = vadd.f32 %v678, %v1042
          %1044 = vmatmul.bf16.gmra.mxu0 %v608
          %v1045 = vpop.f32.mrf.mxu0
          %v1046 = vadd.f32 %v678, %v1045
          %v1047 = vpop.f32.mrf.mxu0
          %v1048 = vadd.f32 %v678, %v1047
          %1049 = vmatmul.bf16.gmra.mxu0 %v610
          %v1050 = vpop.f32.mrf.mxu0
          %v1051 = vadd.f32 %v678, %v1050
          %v1052 = vpop.f32.mrf.mxu0
          %v1053 = vadd.f32 %v678, %v1052
          %1054 = vdwg.mxu0
          %1055 = vmatpush.bf16.msra.mxu0 %v938
          %1056 = vmatpush.bf16.msra.mxu0 %v934
          %1057 = vmatpush.bf16.msra.mxu0 %v930
          %1058 = vmatpush.bf16.msra.mxu0 %v926
          %1059 = vmatpush.bf16.msra.mxu0 %v922
          %1060 = vmatpush.bf16.msra.mxu0 %v918
          %1061 = vmatpush.bf16.msra.mxu0 %v914
          %1062 = vmatpush.bf16.msra.mxu0 %v910
          %1063 = vmatmul.bf16.gmra.mxu0 %v597
          %v1064 = vpop.f32.mrf.mxu0
          %v1065 = vadd.f32 %v1016, %v1064
          %v1066 = vpop.f32.mrf.mxu0
          %v1067 = vadd.f32 %v1018, %v1066
          %1068 = vmatmul.bf16.gmra.mxu0 %v599
          %v1069 = vpop.f32.mrf.mxu0
          %v1070 = vadd.f32 %v1021, %v1069
          %v1071 = vpop.f32.mrf.mxu0
          %v1072 = vadd.f32 %v1023, %v1071
          %1073 = vmatmul.bf16.gmra.mxu0 %v601
          %v1074 = vpop.f32.mrf.mxu0
          %v1075 = vadd.f32 %v1026, %v1074
          %v1076 = vpop.f32.mrf.mxu0
          %v1077 = vadd.f32 %v1028, %v1076
          %1078 = vmatmul.bf16.gmra.mxu0 %v603
          %v1079 = vpop.f32.mrf.mxu0
          %v1080 = vadd.f32 %v1031, %v1079
          %v1081 = vpop.f32.mrf.mxu0
          %v1082 = vadd.f32 %v1033, %v1081
          %1083 = vmatmul.bf16.gmra.mxu0 %v605
          %v1084 = vpop.f32.mrf.mxu0
          %v1085 = vadd.f32 %v1036, %v1084
          %v1086 = vpop.f32.mrf.mxu0
          %v1087 = vadd.f32 %v1038, %v1086
          %1088 = vmatmul.bf16.gmra.mxu0 %v607
          %v1089 = vpop.f32.mrf.mxu0
          %v1090 = vadd.f32 %v1041, %v1089
          %v1091 = vpop.f32.mrf.mxu0
          %v1092 = vadd.f32 %v1043, %v1091
          %1093 = vmatmul.bf16.gmra.mxu0 %v609
          %v1094 = vpop.f32.mrf.mxu0
          %v1095 = vadd.f32 %v1046, %v1094
          %v1096 = vpop.f32.mrf.mxu0
          %v1097 = vadd.f32 %v1048, %v1096
          %1098 = vmatmul.bf16.gmra.mxu0 %v611
          %v1099 = vpop.f32.mrf.mxu0
          %v1100 = vadd.f32 %v1051, %v1099
          %v1101 = vpop.f32.mrf.mxu0
          %v1102 = vadd.f32 %v1053, %v1101
          %1103 = vdwg.mxu0
          %1104 = vmatpush.bf16.msra.mxu0 %v907
          %1105 = vmatpush.bf16.msra.mxu0 %v903
          %1106 = vmatpush.bf16.msra.mxu0 %v899
          %1107 = vmatpush.bf16.msra.mxu0 %v895
          %1108 = vmatpush.bf16.msra.mxu0 %v891
          %1109 = vmatpush.bf16.msra.mxu0 %v887
          %1110 = vmatpush.bf16.msra.mxu0 %v883
          %1111 = vmatpush.bf16.msra.mxu0 %v879
          %1112 = vmatmul.bf16.gmra.mxu0 %v596
          %v1113 = vpop.f32.mrf.mxu0
          %v1114 = vadd.f32 %v679, %v1113
          %v1115 = vpop.f32.mrf.mxu0
          %v1116 = vadd.f32 %v679, %v1115
          %1117 = vmatmul.bf16.gmra.mxu0 %v598
          %v1118 = vpop.f32.mrf.mxu0
          %v1119 = vadd.f32 %v679, %v1118
          %v1120 = vpop.f32.mrf.mxu0
          %v1121 = vadd.f32 %v679, %v1120
          %1122 = vmatmul.bf16.gmra.mxu0 %v600
          %v1123 = vpop.f32.mrf.mxu0
          %v1124 = vadd.f32 %v679, %v1123
          %v1125 = vpop.f32.mrf.mxu0
          %v1126 = vadd.f32 %v679, %v1125
          %1127 = vmatmul.bf16.gmra.mxu0 %v602
          %v1128 = vpop.f32.mrf.mxu0
          %v1129 = vadd.f32 %v679, %v1128
          %v1130 = vpop.f32.mrf.mxu0
          %v1131 = vadd.f32 %v679, %v1130
          %1132 = vmatmul.bf16.gmra.mxu0 %v604
          %v1133 = vpop.f32.mrf.mxu0
          %v1134 = vadd.f32 %v679, %v1133
          %v1135 = vpop.f32.mrf.mxu0
          %v1136 = vadd.f32 %v679, %v1135
          %1137 = vmatmul.bf16.gmra.mxu0 %v606
          %v1138 = vpop.f32.mrf.mxu0
          %v1139 = vadd.f32 %v679, %v1138
          %v1140 = vpop.f32.mrf.mxu0
          %v1141 = vadd.f32 %v679, %v1140
          %1142 = vmatmul.bf16.gmra.mxu0 %v608
          %v1143 = vpop.f32.mrf.mxu0
          %v1144 = vadd.f32 %v679, %v1143
          %v1145 = vpop.f32.mrf.mxu0
          %v1146 = vadd.f32 %v679, %v1145
          %1147 = vmatmul.bf16.gmra.mxu0 %v610
          %v1148 = vpop.f32.mrf.mxu0
          %v1149 = vadd.f32 %v679, %v1148
          %v1150 = vpop.f32.mrf.mxu0
          %v1151 = vadd.f32 %v679, %v1150
          %1152 = vdwg.mxu0
          %1153 = vmatpush.bf16.msra.mxu0 %v939
          %1154 = vmatpush.bf16.msra.mxu0 %v935
          %1155 = vmatpush.bf16.msra.mxu0 %v931
          %1156 = vmatpush.bf16.msra.mxu0 %v927
          %1157 = vmatpush.bf16.msra.mxu0 %v923
          %1158 = vmatpush.bf16.msra.mxu0 %v919
          %1159 = vmatpush.bf16.msra.mxu0 %v915
          %1160 = vmatpush.bf16.msra.mxu0 %v911
          %1161 = vmatmul.bf16.gmra.mxu0 %v597
          %v1162 = vpop.f32.mrf.mxu0
          %v1163 = vadd.f32 %v1114, %v1162
          %v1164 = vpop.f32.mrf.mxu0
          %v1165 = vadd.f32 %v1116, %v1164
          %1166 = vmatmul.bf16.gmra.mxu0 %v599
          %v1167 = vpop.f32.mrf.mxu0
          %v1168 = vadd.f32 %v1119, %v1167
          %v1169 = vpop.f32.mrf.mxu0
          %v1170 = vadd.f32 %v1121, %v1169
          %1171 = vmatmul.bf16.gmra.mxu0 %v601
          %v1172 = vpop.f32.mrf.mxu0
          %v1173 = vadd.f32 %v1124, %v1172
          %v1174 = vpop.f32.mrf.mxu0
          %v1175 = vadd.f32 %v1126, %v1174
          %1176 = vmatmul.bf16.gmra.mxu0 %v603
          %v1177 = vpop.f32.mrf.mxu0
          %v1178 = vadd.f32 %v1129, %v1177
          %v1179 = vpop.f32.mrf.mxu0
          %v1180 = vadd.f32 %v1131, %v1179
          %1181 = vmatmul.bf16.gmra.mxu0 %v605
          %v1182 = vpop.f32.mrf.mxu0
          %v1183 = vadd.f32 %v1134, %v1182
          %v1184 = vpop.f32.mrf.mxu0
          %v1185 = vadd.f32 %v1136, %v1184
          %1186 = vmatmul.bf16.gmra.mxu0 %v607
          %v1187 = vpop.f32.mrf.mxu0
          %v1188 = vadd.f32 %v1139, %v1187
          %v1189 = vpop.f32.mrf.mxu0
          %v1190 = vadd.f32 %v1141, %v1189
          %1191 = vmatmul.bf16.gmra.mxu0 %v609
          %v1192 = vpop.f32.mrf.mxu0
          %v1193 = vadd.f32 %v1144, %v1192
          %v1194 = vpop.f32.mrf.mxu0
          %v1195 = vadd.f32 %v1146, %v1194
          %1196 = vmatmul.bf16.gmra.mxu0 %v611
          %v1197 = vpop.f32.mrf.mxu0
          %v1198 = vadd.f32 %v1149, %v1197
          %v1199 = vpop.f32.mrf.mxu0
          %v1200 = vadd.f32 %v1151, %v1199
          %1201 = vdwg.mxu0
          %1202 = vmatpush.bf16.msra.mxu0 %v908
          %1203 = vmatpush.bf16.msra.mxu0 %v904
          %1204 = vmatpush.bf16.msra.mxu0 %v900
          %1205 = vmatpush.bf16.msra.mxu0 %v896
          %1206 = vmatpush.bf16.msra.mxu0 %v892
          %1207 = vmatpush.bf16.msra.mxu0 %v888
          %1208 = vmatpush.bf16.msra.mxu0 %v884
          %1209 = vmatpush.bf16.msra.mxu0 %v880
          %1210 = vmatmul.bf16.gmra.mxu0 %v596
          %v1211 = vpop.f32.mrf.mxu0
          %v1212 = vadd.f32 %v680, %v1211
          %v1213 = vpop.f32.mrf.mxu0
          %v1214 = vadd.f32 %v680, %v1213
          %1215 = vmatmul.bf16.gmra.mxu0 %v598
          %v1216 = vpop.f32.mrf.mxu0
          %v1217 = vadd.f32 %v680, %v1216
          %v1218 = vpop.f32.mrf.mxu0
          %v1219 = vadd.f32 %v680, %v1218
          %1220 = vmatmul.bf16.gmra.mxu0 %v600
          %v1221 = vpop.f32.mrf.mxu0
          %v1222 = vadd.f32 %v680, %v1221
          %v1223 = vpop.f32.mrf.mxu0
          %v1224 = vadd.f32 %v680, %v1223
          %1225 = vmatmul.bf16.gmra.mxu0 %v602
          %v1226 = vpop.f32.mrf.mxu0
          %v1227 = vadd.f32 %v680, %v1226
          %v1228 = vpop.f32.mrf.mxu0
          %v1229 = vadd.f32 %v680, %v1228
          %1230 = vmatmul.bf16.gmra.mxu0 %v604
          %v1231 = vpop.f32.mrf.mxu0
          %v1232 = vadd.f32 %v680, %v1231
          %v1233 = vpop.f32.mrf.mxu0
          %v1234 = vadd.f32 %v680, %v1233
          %1235 = vmatmul.bf16.gmra.mxu0 %v606
          %v1236 = vpop.f32.mrf.mxu0
          %v1237 = vadd.f32 %v680, %v1236
          %v1238 = vpop.f32.mrf.mxu0
          %v1239 = vadd.f32 %v680, %v1238
          %1240 = vmatmul.bf16.gmra.mxu0 %v608
          %v1241 = vpop.f32.mrf.mxu0
          %v1242 = vadd.f32 %v680, %v1241
          %v1243 = vpop.f32.mrf.mxu0
          %v1244 = vadd.f32 %v680, %v1243
          %1245 = vmatmul.bf16.gmra.mxu0 %v610
          %v1246 = vpop.f32.mrf.mxu0
          %v1247 = vadd.f32 %v680, %v1246
          %v1248 = vpop.f32.mrf.mxu0
          %v1249 = vadd.f32 %v680, %v1248
          %1250 = vdwg.mxu0
          %1251 = vmatpush.bf16.msra.mxu0 %v940
          %1252 = vmatpush.bf16.msra.mxu0 %v936
          %1253 = vmatpush.bf16.msra.mxu0 %v932
          %1254 = vmatpush.bf16.msra.mxu0 %v928
          %1255 = vmatpush.bf16.msra.mxu0 %v924
          %1256 = vmatpush.bf16.msra.mxu0 %v920
          %1257 = vmatpush.bf16.msra.mxu0 %v916
          %1258 = vmatpush.bf16.msra.mxu0 %v912
          %1259 = vmatmul.bf16.gmra.mxu0 %v597
          %v1260 = vpop.f32.mrf.mxu0
          %v1261 = vadd.f32 %v1212, %v1260
          %v1262 = vpop.f32.mrf.mxu0
          %v1263 = vadd.f32 %v1214, %v1262
          %1264 = vmatmul.bf16.gmra.mxu0 %v599
          %v1265 = vpop.f32.mrf.mxu0
          %v1266 = vadd.f32 %v1217, %v1265
          %v1267 = vpop.f32.mrf.mxu0
          %v1268 = vadd.f32 %v1219, %v1267
          %1269 = vmatmul.bf16.gmra.mxu0 %v601
          %v1270 = vpop.f32.mrf.mxu0
          %v1271 = vadd.f32 %v1222, %v1270
          %v1272 = vpop.f32.mrf.mxu0
          %v1273 = vadd.f32 %v1224, %v1272
          %1274 = vmatmul.bf16.gmra.mxu0 %v603
          %v1275 = vpop.f32.mrf.mxu0
          %v1276 = vadd.f32 %v1227, %v1275
          %v1277 = vpop.f32.mrf.mxu0
          %v1278 = vadd.f32 %v1229, %v1277
          %1279 = vmatmul.bf16.gmra.mxu0 %v605
          %v1280 = vpop.f32.mrf.mxu0
          %v1281 = vadd.f32 %v1232, %v1280
          %v1282 = vpop.f32.mrf.mxu0
          %v1283 = vadd.f32 %v1234, %v1282
          %1284 = vmatmul.bf16.gmra.mxu0 %v607
          %v1285 = vpop.f32.mrf.mxu0
          %v1286 = vadd.f32 %v1237, %v1285
          %v1287 = vpop.f32.mrf.mxu0
          %v1288 = vadd.f32 %v1239, %v1287
          %1289 = vmatmul.bf16.gmra.mxu0 %v609
          %v1290 = vpop.f32.mrf.mxu0
          %v1291 = vadd.f32 %v1242, %v1290
          %v1292 = vpop.f32.mrf.mxu0
          %v1293 = vadd.f32 %v1244, %v1292
          %1294 = vmatmul.bf16.gmra.mxu0 %v611
          %v1295 = vpop.f32.mrf.mxu0
          %v1296 = vadd.f32 %v1247, %v1295
          %v1297 = vpop.f32.mrf.mxu0
          %v1298 = vadd.f32 %v1249, %v1297
          %1299 = vdwg.mxu0
          %1300 = vmatpush.bf16.msra.mxu0 %v909
          %1301 = vmatpush.bf16.msra.mxu0 %v905
          %1302 = vmatpush.bf16.msra.mxu0 %v901
          %1303 = vmatpush.bf16.msra.mxu0 %v897
          %1304 = vmatpush.bf16.msra.mxu0 %v893
          %1305 = vmatpush.bf16.msra.mxu0 %v889
          %1306 = vmatpush.bf16.msra.mxu0 %v885
          %1307 = vmatpush.bf16.msra.mxu0 %v881
          %1308 = vmatmul.bf16.gmra.mxu0 %v596
          %v1309 = vpop.f32.mrf.mxu0
          %v1310 = vadd.f32 %v681, %v1309
          %v1311 = vpop.f32.mrf.mxu0
          %v1312 = vadd.f32 %v681, %v1311
          %1313 = vmatmul.bf16.gmra.mxu0 %v598
          %v1314 = vpop.f32.mrf.mxu0
          %v1315 = vadd.f32 %v681, %v1314
          %v1316 = vpop.f32.mrf.mxu0
          %v1317 = vadd.f32 %v681, %v1316
          %1318 = vmatmul.bf16.gmra.mxu0 %v600
          %v1319 = vpop.f32.mrf.mxu0
          %v1320 = vadd.f32 %v681, %v1319
          %v1321 = vpop.f32.mrf.mxu0
          %v1322 = vadd.f32 %v681, %v1321
          %1323 = vmatmul.bf16.gmra.mxu0 %v602
          %v1324 = vpop.f32.mrf.mxu0
          %v1325 = vadd.f32 %v681, %v1324
          %v1326 = vpop.f32.mrf.mxu0
          %v1327 = vadd.f32 %v681, %v1326
          %1328 = vmatmul.bf16.gmra.mxu0 %v604
          %v1329 = vpop.f32.mrf.mxu0
          %v1330 = vadd.f32 %v681, %v1329
          %v1331 = vpop.f32.mrf.mxu0
          %v1332 = vadd.f32 %v681, %v1331
          %1333 = vmatmul.bf16.gmra.mxu0 %v606
          %v1334 = vpop.f32.mrf.mxu0
          %v1335 = vadd.f32 %v681, %v1334
          %v1336 = vpop.f32.mrf.mxu0
          %v1337 = vadd.f32 %v681, %v1336
          %1338 = vmatmul.bf16.gmra.mxu0 %v608
          %v1339 = vpop.f32.mrf.mxu0
          %v1340 = vadd.f32 %v681, %v1339
          %v1341 = vpop.f32.mrf.mxu0
          %v1342 = vadd.f32 %v681, %v1341
          %1343 = vmatmul.bf16.gmra.mxu0 %v610
          %v1344 = vpop.f32.mrf.mxu0
          %v1345 = vadd.f32 %v681, %v1344
          %v1346 = vpop.f32.mrf.mxu0
          %v1347 = vadd.f32 %v681, %v1346
          %1348 = vdwg.mxu0
          %1349 = vmatpush.bf16.msra.mxu0 %v941
          %1350 = vmatpush.bf16.msra.mxu0 %v937
          %1351 = vmatpush.bf16.msra.mxu0 %v933
          %1352 = vmatpush.bf16.msra.mxu0 %v929
          %1353 = vmatpush.bf16.msra.mxu0 %v925
          %1354 = vmatpush.bf16.msra.mxu0 %v921
          %1355 = vmatpush.bf16.msra.mxu0 %v917
          %1356 = vmatpush.bf16.msra.mxu0 %v913
          %1357 = vmatmul.bf16.gmra.mxu0 %v597
          %v1358 = vpop.f32.mrf.mxu0
          %v1359 = vadd.f32 %v1310, %v1358
          %v1360 = vpop.f32.mrf.mxu0
          %v1361 = vadd.f32 %v1312, %v1360
          %1362 = vmatmul.bf16.gmra.mxu0 %v599
          %v1363 = vpop.f32.mrf.mxu0
          %v1364 = vadd.f32 %v1315, %v1363
          %v1365 = vpop.f32.mrf.mxu0
          %v1366 = vadd.f32 %v1317, %v1365
          %1367 = vmatmul.bf16.gmra.mxu0 %v601
          %v1368 = vpop.f32.mrf.mxu0
          %v1369 = vadd.f32 %v1320, %v1368
          %v1370 = vpop.f32.mrf.mxu0
          %v1371 = vadd.f32 %v1322, %v1370
          %1372 = vmatmul.bf16.gmra.mxu0 %v603
          %v1373 = vpop.f32.mrf.mxu0
          %v1374 = vadd.f32 %v1325, %v1373
          %v1375 = vpop.f32.mrf.mxu0
          %v1376 = vadd.f32 %v1327, %v1375
          %1377 = vmatmul.bf16.gmra.mxu0 %v605
          %v1378 = vpop.f32.mrf.mxu0
          %v1379 = vadd.f32 %v1330, %v1378
          %v1380 = vpop.f32.mrf.mxu0
          %v1381 = vadd.f32 %v1332, %v1380
          %1382 = vmatmul.bf16.gmra.mxu0 %v607
          %v1383 = vpop.f32.mrf.mxu0
          %v1384 = vadd.f32 %v1335, %v1383
          %v1385 = vpop.f32.mrf.mxu0
          %v1386 = vadd.f32 %v1337, %v1385
          %1387 = vmatmul.bf16.gmra.mxu0 %v609
          %v1388 = vpop.f32.mrf.mxu0
          %v1389 = vadd.f32 %v1340, %v1388
          %v1390 = vpop.f32.mrf.mxu0
          %v1391 = vadd.f32 %v1342, %v1390
          %1392 = vmatmul.bf16.gmra.mxu0 %v611
          %v1393 = vpop.f32.mrf.mxu0
          %v1394 = vadd.f32 %v1345, %v1393
          %v1395 = vpop.f32.mrf.mxu0
          %v1396 = vadd.f32 %v1347, %v1395
          %1397 = vdwg.mxu0
          %v1398 = vmax.f32 %v1065, 0.0
          %v1399 = vmax.f32 %v1163, 0.0
          %v1400 = vmax.f32 %v1261, 0.0
          %v1401 = vmax.f32 %v1359, 0.0
          %v1402 = vmax.f32 %v1067, 0.0
          %v1403 = vmax.f32 %v1165, 0.0
          %v1404 = vmax.f32 %v1263, 0.0
          %v1405 = vmax.f32 %v1361, 0.0
          %v1406 = vmax.f32 %v1070, 0.0
          %v1407 = vmax.f32 %v1168, 0.0
          %v1408 = vmax.f32 %v1266, 0.0
          %v1409 = vmax.f32 %v1364, 0.0
          %v1410 = vmax.f32 %v1072, 0.0
          %v1411 = vmax.f32 %v1170, 0.0
          %v1412 = vmax.f32 %v1268, 0.0
          %v1413 = vmax.f32 %v1366, 0.0
          %v1414 = vmax.f32 %v1075, 0.0
          %v1415 = vmax.f32 %v1173, 0.0
          %v1416 = vmax.f32 %v1271, 0.0
          %v1417 = vmax.f32 %v1369, 0.0
          %v1418 = vmax.f32 %v1077, 0.0
          %v1419 = vmax.f32 %v1175, 0.0
          %v1420 = vmax.f32 %v1273, 0.0
          %v1421 = vmax.f32 %v1371, 0.0
          %v1422 = vmax.f32 %v1080, 0.0
          %v1423 = vmax.f32 %v1178, 0.0
          %v1424 = vmax.f32 %v1276, 0.0
          %v1425 = vmax.f32 %v1374, 0.0
          %v1426 = vmax.f32 %v1082, 0.0
          %v1427 = vmax.f32 %v1180, 0.0
          %v1428 = vmax.f32 %v1278, 0.0
          %v1429 = vmax.f32 %v1376, 0.0
          %v1430 = vmax.f32 %v1085, 0.0
          %v1431 = vmax.f32 %v1183, 0.0
          %v1432 = vmax.f32 %v1281, 0.0
          %v1433 = vmax.f32 %v1379, 0.0
          %v1434 = vmax.f32 %v1087, 0.0
          %v1435 = vmax.f32 %v1185, 0.0
          %v1436 = vmax.f32 %v1283, 0.0
          %v1437 = vmax.f32 %v1381, 0.0
          %v1438 = vmax.f32 %v1090, 0.0
          %v1439 = vmax.f32 %v1188, 0.0
          %v1440 = vmax.f32 %v1286, 0.0
          %v1441 = vmax.f32 %v1384, 0.0
          %v1442 = vmax.f32 %v1092, 0.0
          %v1443 = vmax.f32 %v1190, 0.0
          %v1444 = vmax.f32 %v1288, 0.0
          %v1445 = vmax.f32 %v1386, 0.0
          %v1446 = vmax.f32 %v1095, 0.0
          %v1447 = vmax.f32 %v1193, 0.0
          %v1448 = vmax.f32 %v1291, 0.0
          %v1449 = vmax.f32 %v1389, 0.0
          %v1450 = vmax.f32 %v1097, 0.0
          %v1451 = vmax.f32 %v1195, 0.0
          %v1452 = vmax.f32 %v1293, 0.0
          %v1453 = vmax.f32 %v1391, 0.0
          %v1454 = vmax.f32 %v1100, 0.0
          %v1455 = vmax.f32 %v1198, 0.0
          %v1456 = vmax.f32 %v1296, 0.0
          %v1457 = vmax.f32 %v1394, 0.0
          %v1458 = vmax.f32 %v1102, 0.0
          %v1459 = vmax.f32 %v1200, 0.0
          %v1460 = vmax.f32 %v1298, 0.0
          %v1461 = vmax.f32 %v1396, 0.0
          %1462 = vst [vmem:[#allocation2] sm:$0xff] %v1398
          %1463 = vst [vmem:[#allocation2 + $0x8] sm:$0xff] %v1399
          %1464 = vst [vmem:[#allocation2 + $0x10] sm:$0xff] %v1400
          %1465 = vst [vmem:[#allocation2 + $0x18] sm:$0xff] %v1401
          %1466 = vst [vmem:[#allocation2 + $0x20] sm:$0xff] %v1402
          %1467 = vst [vmem:[#allocation2 + $0x28] sm:$0xff] %v1403
          %1468 = vst [vmem:[#allocation2 + $0x30] sm:$0xff] %v1404
          %1469 = vst [vmem:[#allocation2 + $0x38] sm:$0xff] %v1405
          %1470 = vst [vmem:[#allocation2 + $0x40] sm:$0xff] %v1406
          %1471 = vst [vmem:[#allocation2 + $0x48] sm:$0xff] %v1407
          %1472 = vst [vmem:[#allocation2 + $0x50] sm:$0xff] %v1408
          %1473 = vst [vmem:[#allocation2 + $0x58] sm:$0xff] %v1409
          %1474 = vst [vmem:[#allocation2 + $0x60] sm:$0xff] %v1410
          %1475 = vst [vmem:[#allocation2 + $0x68] sm:$0xff] %v1411
          %1476 = vst [vmem:[#allocation2 + $0x70] sm:$0xff] %v1412
          %1477 = vst [vmem:[#allocation2 + $0x78] sm:$0xff] %v1413
          %1478 = vst [vmem:[#allocation2 + $0x80] sm:$0xff] %v1414
          %1479 = vst [vmem:[#allocation2 + $0x88] sm:$0xff] %v1415
          %1480 = vst [vmem:[#allocation2 + $0x90] sm:$0xff] %v1416
          %1481 = vst [vmem:[#allocation2 + $0x98] sm:$0xff] %v1417
          %1482 = vst [vmem:[#allocation2 + $0xa0] sm:$0xff] %v1418
          %1483 = vst [vmem:[#allocation2 + $0xa8] sm:$0xff] %v1419
          %1484 = vst [vmem:[#allocation2 + $0xb0] sm:$0xff] %v1420
          %1485 = vst [vmem:[#allocation2 + $0xb8] sm:$0xff] %v1421
          %1486 = vst [vmem:[#allocation2 + $0xc0] sm:$0xff] %v1422
          %1487 = vst [vmem:[#allocation2 + $0xc8] sm:$0xff] %v1423
          %1488 = vst [vmem:[#allocation2 + $0xd0] sm:$0xff] %v1424
          %1489 = vst [vmem:[#allocation2 + $0xd8] sm:$0xff] %v1425
          %1490 = vst [vmem:[#allocation2 + $0xe0] sm:$0xff] %v1426
          %1491 = vst [vmem:[#allocation2 + $0xe8] sm:$0xff] %v1427
          %1492 = vst [vmem:[#allocation2 + $0xf0] sm:$0xff] %v1428
          %1493 = vst [vmem:[#allocation2 + $0xf8] sm:$0xff] %v1429
          %1494 = vst [vmem:[#allocation2 + $0x100] sm:$0xff] %v1430
          %1495 = vst [vmem:[#allocation2 + $0x108] sm:$0xff] %v1431
          %1496 = vst [vmem:[#allocation2 + $0x110] sm:$0xff] %v1432
          %1497 = vst [vmem:[#allocation2 + $0x118] sm:$0xff] %v1433
          %1498 = vst [vmem:[#allocation2 + $0x120] sm:$0xff] %v1434
          %1499 = vst [vmem:[#allocation2 + $0x128] sm:$0xff] %v1435
          %1500 = vst [vmem:[#allocation2 + $0x130] sm:$0xff] %v1436
          %1501 = vst [vmem:[#allocation2 + $0x138] sm:$0xff] %v1437
          %1502 = vst [vmem:[#allocation2 + $0x140] sm:$0xff] %v1438
          %1503 = vst [vmem:[#allocation2 + $0x148] sm:$0xff] %v1439
          %1504 = vst [vmem:[#allocation2 + $0x150] sm:$0xff] %v1440
          %1505 = vst [vmem:[#allocation2 + $0x158] sm:$0xff] %v1441
          %1506 = vst [vmem:[#allocation2 + $0x160] sm:$0xff] %v1442
          %1507 = vst [vmem:[#allocation2 + $0x168] sm:$0xff] %v1443
          %1508 = vst [vmem:[#allocation2 + $0x170] sm:$0xff] %v1444
          %1509 = vst [vmem:[#allocation2 + $0x178] sm:$0xff] %v1445
          %1510 = vst [vmem:[#allocation2 + $0x180] sm:$0xff] %v1446
          %1511 = vst [vmem:[#allocation2 + $0x188] sm:$0xff] %v1447
          %1512 = vst [vmem:[#allocation2 + $0x190] sm:$0xff] %v1448
          %1513 = vst [vmem:[#allocation2 + $0x198] sm:$0xff] %v1449
          %1514 = vst [vmem:[#allocation2 + $0x1a0] sm:$0xff] %v1450
          %1515 = vst [vmem:[#allocation2 + $0x1a8] sm:$0xff] %v1451
          %1516 = vst [vmem:[#allocation2 + $0x1b0] sm:$0xff] %v1452
          %1517 = vst [vmem:[#allocation2 + $0x1b8] sm:$0xff] %v1453
          %1518 = vst [vmem:[#allocation2 + $0x1c0] sm:$0xff] %v1454
          %1519 = vst [vmem:[#allocation2 + $0x1c8] sm:$0xff] %v1455
          %1520 = vst [vmem:[#allocation2 + $0x1d0] sm:$0xff] %v1456
          %1521 = vst [vmem:[#allocation2 + $0x1d8] sm:$0xff] %v1457
          %1522 = vst [vmem:[#allocation2 + $0x1e0] sm:$0xff] %v1458
          %1523 = vst [vmem:[#allocation2 + $0x1e8] sm:$0xff] %v1459
          %1524 = vst [vmem:[#allocation2 + $0x1f0] sm:$0xff] %v1460
          %1525 = vst [vmem:[#allocation2 + $0x1f8] sm:$0xff] %v1461
        $region60: #{tpu_custom_call.1} parent=47 // pred_fallthru
          _
        %v1526 = vld [vmem:[#allocation2] sm:$0xff]
        %v1527 = vld [vmem:[#allocation2 + $0x8] sm:$0xff]
        %v1528 = vld [vmem:[#allocation2 + $0x10] sm:$0xff]
        %v1529 = vld [vmem:[#allocation2 + $0x18] sm:$0xff]
        %v1530 = vld [vmem:[#allocation2 + $0x20] sm:$0xff]
        %v1531 = vld [vmem:[#allocation2 + $0x28] sm:$0xff]
        %v1532 = vld [vmem:[#allocation2 + $0x30] sm:$0xff]
        %v1533 = vld [vmem:[#allocation2 + $0x38] sm:$0xff]
        %v1534 = vld [vmem:[#allocation2 + $0x40] sm:$0xff]
        %v1535 = vld [vmem:[#allocation2 + $0x48] sm:$0xff]
        %v1536 = vld [vmem:[#allocation2 + $0x50] sm:$0xff]
        %v1537 = vld [vmem:[#allocation2 + $0x58] sm:$0xff]
        %v1538 = vld [vmem:[#allocation2 + $0x60] sm:$0xff]
        %v1539 = vld [vmem:[#allocation2 + $0x68] sm:$0xff]
        %v1540 = vld [vmem:[#allocation2 + $0x70] sm:$0xff]
        %v1541 = vld [vmem:[#allocation2 + $0x78] sm:$0xff]
        %v1542 = vld [vmem:[#allocation2 + $0x80] sm:$0xff]
        %v1543 = vld [vmem:[#allocation2 + $0x88] sm:$0xff]
        %v1544 = vld [vmem:[#allocation2 + $0x90] sm:$0xff]
        %v1545 = vld [vmem:[#allocation2 + $0x98] sm:$0xff]
        %v1546 = vld [vmem:[#allocation2 + $0xa0] sm:$0xff]
        %v1547 = vld [vmem:[#allocation2 + $0xa8] sm:$0xff]
        %v1548 = vld [vmem:[#allocation2 + $0xb0] sm:$0xff]
        %v1549 = vld [vmem:[#allocation2 + $0xb8] sm:$0xff]
        %v1550 = vld [vmem:[#allocation2 + $0xc0] sm:$0xff]
        %v1551 = vld [vmem:[#allocation2 + $0xc8] sm:$0xff]
        %v1552 = vld [vmem:[#allocation2 + $0xd0] sm:$0xff]
        %v1553 = vld [vmem:[#allocation2 + $0xd8] sm:$0xff]
        %v1554 = vld [vmem:[#allocation2 + $0xe0] sm:$0xff]
        %v1555 = vld [vmem:[#allocation2 + $0xe8] sm:$0xff]
        %v1556 = vld [vmem:[#allocation2 + $0xf0] sm:$0xff]
        %v1557 = vld [vmem:[#allocation2 + $0xf8] sm:$0xff]
        %v1558 = vld [vmem:[#allocation2 + $0x100] sm:$0xff]
        %v1559 = vld [vmem:[#allocation2 + $0x108] sm:$0xff]
        %v1560 = vld [vmem:[#allocation2 + $0x110] sm:$0xff]
        %v1561 = vld [vmem:[#allocation2 + $0x118] sm:$0xff]
        %v1562 = vld [vmem:[#allocation2 + $0x120] sm:$0xff]
        %v1563 = vld [vmem:[#allocation2 + $0x128] sm:$0xff]
        %v1564 = vld [vmem:[#allocation2 + $0x130] sm:$0xff]
        %v1565 = vld [vmem:[#allocation2 + $0x138] sm:$0xff]
        %v1566 = vld [vmem:[#allocation2 + $0x140] sm:$0xff]
        %v1567 = vld [vmem:[#allocation2 + $0x148] sm:$0xff]
        %v1568 = vld [vmem:[#allocation2 + $0x150] sm:$0xff]
        %v1569 = vld [vmem:[#allocation2 + $0x158] sm:$0xff]
        %v1570 = vld [vmem:[#allocation2 + $0x160] sm:$0xff]
        %v1571 = vld [vmem:[#allocation2 + $0x168] sm:$0xff]
        %v1572 = vld [vmem:[#allocation2 + $0x170] sm:$0xff]
        %v1573 = vld [vmem:[#allocation2 + $0x178] sm:$0xff]
        %v1574 = vld [vmem:[#allocation2 + $0x180] sm:$0xff]
        %v1575 = vld [vmem:[#allocation2 + $0x188] sm:$0xff]
        %v1576 = vld [vmem:[#allocation2 + $0x190] sm:$0xff]
        %v1577 = vld [vmem:[#allocation2 + $0x198] sm:$0xff]
        %v1578 = vld [vmem:[#allocation2 + $0x1a0] sm:$0xff]
        %v1579 = vld [vmem:[#allocation2 + $0x1a8] sm:$0xff]
        %v1580 = vld [vmem:[#allocation2 + $0x1b0] sm:$0xff]
        %v1581 = vld [vmem:[#allocation2 + $0x1b8] sm:$0xff]
        %v1582 = vld [vmem:[#allocation2 + $0x1c0] sm:$0xff]
        %v1583 = vld [vmem:[#allocation2 + $0x1c8] sm:$0xff]
        %v1584 = vld [vmem:[#allocation2 + $0x1d0] sm:$0xff]
        %v1585 = vld [vmem:[#allocation2 + $0x1d8] sm:$0xff]
        %v1586 = vld [vmem:[#allocation2 + $0x1e0] sm:$0xff]
        %v1587 = vld [vmem:[#allocation2 + $0x1e8] sm:$0xff]
        %v1588 = vld [vmem:[#allocation2 + $0x1f0] sm:$0xff]
        %v1589 = vld [vmem:[#allocation2 + $0x1f8] sm:$0xff]
        %v1590 = vpack.c.bf16 %v1530, %v1526
        %v1591 = vpack.c.bf16 %v1531, %v1527
        %v1592 = vpack.c.bf16 %v1532, %v1528
        %v1593 = vpack.c.bf16 %v1533, %v1529
        %v1594 = vpack.c.bf16 %v1538, %v1534
        %v1595 = vpack.c.bf16 %v1539, %v1535
        %v1596 = vpack.c.bf16 %v1540, %v1536
        %v1597 = vpack.c.bf16 %v1541, %v1537
        %v1598 = vpack.c.bf16 %v1546, %v1542
        %v1599 = vpack.c.bf16 %v1547, %v1543
        %v1600 = vpack.c.bf16 %v1548, %v1544
        %v1601 = vpack.c.bf16 %v1549, %v1545
        %v1602 = vpack.c.bf16 %v1554, %v1550
        %v1603 = vpack.c.bf16 %v1555, %v1551
        %v1604 = vpack.c.bf16 %v1556, %v1552
        %v1605 = vpack.c.bf16 %v1557, %v1553
        %v1606 = vpack.c.bf16 %v1562, %v1558
        %v1607 = vpack.c.bf16 %v1563, %v1559
        %v1608 = vpack.c.bf16 %v1564, %v1560
        %v1609 = vpack.c.bf16 %v1565, %v1561
        %v1610 = vpack.c.bf16 %v1570, %v1566
        %v1611 = vpack.c.bf16 %v1571, %v1567
        %v1612 = vpack.c.bf16 %v1572, %v1568
        %v1613 = vpack.c.bf16 %v1573, %v1569
        %v1614 = vpack.c.bf16 %v1578, %v1574
        %v1615 = vpack.c.bf16 %v1579, %v1575
        %v1616 = vpack.c.bf16 %v1580, %v1576
        %v1617 = vpack.c.bf16 %v1581, %v1577
        %v1618 = vpack.c.bf16 %v1586, %v1582
        %v1619 = vpack.c.bf16 %v1587, %v1583
        %v1620 = vpack.c.bf16 %v1588, %v1584
        %v1621 = vpack.c.bf16 %v1589, %v1585
        %v1622 = vld [vmem:[#allocation6] sm:$0xff]
        %v1623 = vld [vmem:[#allocation6 + $0x8] sm:$0xff]
        %v1624 = vld [vmem:[#allocation6 + $0x10] sm:$0xff]
        %v1625 = vld [vmem:[#allocation6 + $0x18] sm:$0xff]
        %v1626 = vld [vmem:[#allocation6 + $0x20] sm:$0xff]
        %v1627 = vld [vmem:[#allocation6 + $0x28] sm:$0xff]
        %v1628 = vld [vmem:[#allocation6 + $0x30] sm:$0xff]
        %v1629 = vld [vmem:[#allocation6 + $0x38] sm:$0xff]
        %v1630 = vld [vmem:[#allocation6 + $0x40] sm:$0xff]
        %v1631 = vld [vmem:[#allocation6 + $0x48] sm:$0xff]
        %v1632 = vld [vmem:[#allocation6 + $0x50] sm:$0xff]
        %v1633 = vld [vmem:[#allocation6 + $0x58] sm:$0xff]
        %v1634 = vld [vmem:[#allocation6 + $0x60] sm:$0xff]
        %v1635 = vld [vmem:[#allocation6 + $0x68] sm:$0xff]
        %v1636 = vld [vmem:[#allocation6 + $0x70] sm:$0xff]
        %v1637 = vld [vmem:[#allocation6 + $0x78] sm:$0xff]
        %v1638 = vld [vmem:[#allocation6 + $0x80] sm:$0xff]
        %v1639 = vld [vmem:[#allocation6 + $0x88] sm:$0xff]
        %v1640 = vld [vmem:[#allocation6 + $0x90] sm:$0xff]
        %v1641 = vld [vmem:[#allocation6 + $0x98] sm:$0xff]
        %v1642 = vld [vmem:[#allocation6 + $0xa0] sm:$0xff]
        %v1643 = vld [vmem:[#allocation6 + $0xa8] sm:$0xff]
        %v1644 = vld [vmem:[#allocation6 + $0xb0] sm:$0xff]
        %v1645 = vld [vmem:[#allocation6 + $0xb8] sm:$0xff]
        %v1646 = vld [vmem:[#allocation6 + $0xc0] sm:$0xff]
        %v1647 = vld [vmem:[#allocation6 + $0xc8] sm:$0xff]
        %v1648 = vld [vmem:[#allocation6 + $0xd0] sm:$0xff]
        %v1649 = vld [vmem:[#allocation6 + $0xd8] sm:$0xff]
        %v1650 = vld [vmem:[#allocation6 + $0xe0] sm:$0xff]
        %v1651 = vld [vmem:[#allocation6 + $0xe8] sm:$0xff]
        %v1652 = vld [vmem:[#allocation6 + $0xf0] sm:$0xff]
        %v1653 = vld [vmem:[#allocation6 + $0xf8] sm:$0xff]
        %v1654 = vld [vmem:[#allocation6 + $0x100] sm:$0xff]
        %v1655 = vld [vmem:[#allocation6 + $0x108] sm:$0xff]
        %v1656 = vld [vmem:[#allocation6 + $0x110] sm:$0xff]
        %v1657 = vld [vmem:[#allocation6 + $0x118] sm:$0xff]
        %v1658 = vld [vmem:[#allocation6 + $0x120] sm:$0xff]
        %v1659 = vld [vmem:[#allocation6 + $0x128] sm:$0xff]
        %v1660 = vld [vmem:[#allocation6 + $0x130] sm:$0xff]
        %v1661 = vld [vmem:[#allocation6 + $0x138] sm:$0xff]
        %v1662 = vld [vmem:[#allocation6 + $0x140] sm:$0xff]
        %v1663 = vld [vmem:[#allocation6 + $0x148] sm:$0xff]
        %v1664 = vld [vmem:[#allocation6 + $0x150] sm:$0xff]
        %v1665 = vld [vmem:[#allocation6 + $0x158] sm:$0xff]
        %v1666 = vld [vmem:[#allocation6 + $0x160] sm:$0xff]
        %v1667 = vld [vmem:[#allocation6 + $0x168] sm:$0xff]
        %v1668 = vld [vmem:[#allocation6 + $0x170] sm:$0xff]
        %v1669 = vld [vmem:[#allocation6 + $0x178] sm:$0xff]
        %v1670 = vld [vmem:[#allocation6 + $0x180] sm:$0xff]
        %v1671 = vld [vmem:[#allocation6 + $0x188] sm:$0xff]
        %v1672 = vld [vmem:[#allocation6 + $0x190] sm:$0xff]
        %v1673 = vld [vmem:[#allocation6 + $0x198] sm:$0xff]
        %v1674 = vld [vmem:[#allocation6 + $0x1a0] sm:$0xff]
        %v1675 = vld [vmem:[#allocation6 + $0x1a8] sm:$0xff]
        %v1676 = vld [vmem:[#allocation6 + $0x1b0] sm:$0xff]
        %v1677 = vld [vmem:[#allocation6 + $0x1b8] sm:$0xff]
        %v1678 = vld [vmem:[#allocation6 + $0x1c0] sm:$0xff]
        %v1679 = vld [vmem:[#allocation6 + $0x1c8] sm:$0xff]
        %v1680 = vld [vmem:[#allocation6 + $0x1d0] sm:$0xff]
        %v1681 = vld [vmem:[#allocation6 + $0x1d8] sm:$0xff]
        %v1682 = vld [vmem:[#allocation6 + $0x1e0] sm:$0xff]
        %v1683 = vld [vmem:[#allocation6 + $0x1e8] sm:$0xff]
        %v1684 = vld [vmem:[#allocation6 + $0x1f0] sm:$0xff]
        %v1685 = vld [vmem:[#allocation6 + $0x1f8] sm:$0xff]
        %v1686 = vld [vmem:[%s353] sm:$0x3]
        %v1688 = vperm.slane %v1686, 0
        %v1689 = vperm.slane %v1686, 1
        %v1756 = vunpack.c.l.b16 %v1622
        %v1757 = vunpack.c.h.b16 %v1622
        %v1758 = vunpack.c.l.b16 %v1623
        %v1759 = vunpack.c.h.b16 %v1623
        %v1760 = vunpack.c.l.b16 %v1624
        %v1761 = vunpack.c.h.b16 %v1624
        %v1762 = vunpack.c.l.b16 %v1625
        %v1763 = vunpack.c.h.b16 %v1625
        %v1764 = vunpack.c.l.b16 %v1626
        %v1765 = vunpack.c.h.b16 %v1626
        %v1766 = vunpack.c.l.b16 %v1627
        %v1767 = vunpack.c.h.b16 %v1627
        %v1768 = vunpack.c.l.b16 %v1628
        %v1769 = vunpack.c.h.b16 %v1628
        %v1770 = vunpack.c.l.b16 %v1629
        %v1771 = vunpack.c.h.b16 %v1629
        %v1772 = vunpack.c.l.b16 %v1630
        %v1773 = vunpack.c.h.b16 %v1630
        %v1774 = vunpack.c.l.b16 %v1631
        %v1775 = vunpack.c.h.b16 %v1631
        %v1776 = vunpack.c.l.b16 %v1632
        %v1777 = vunpack.c.h.b16 %v1632
        %v1778 = vunpack.c.l.b16 %v1633
        %v1779 = vunpack.c.h.b16 %v1633
        %v1780 = vunpack.c.l.b16 %v1634
        %v1781 = vunpack.c.h.b16 %v1634
        %v1782 = vunpack.c.l.b16 %v1635
        %v1783 = vunpack.c.h.b16 %v1635
        %v1784 = vunpack.c.l.b16 %v1636
        %v1785 = vunpack.c.h.b16 %v1636
        %v1786 = vunpack.c.l.b16 %v1637
        %v1787 = vunpack.c.h.b16 %v1637
        %v1788 = vunpack.c.l.b16 %v1638
        %v1789 = vunpack.c.h.b16 %v1638
        %v1790 = vunpack.c.l.b16 %v1639
        %v1791 = vunpack.c.h.b16 %v1639
        %v1792 = vunpack.c.l.b16 %v1640
        %v1793 = vunpack.c.h.b16 %v1640
        %v1794 = vunpack.c.l.b16 %v1641
        %v1795 = vunpack.c.h.b16 %v1641
        %v1796 = vunpack.c.l.b16 %v1642
        %v1797 = vunpack.c.h.b16 %v1642
        %v1798 = vunpack.c.l.b16 %v1643
        %v1799 = vunpack.c.h.b16 %v1643
        %v1800 = vunpack.c.l.b16 %v1644
        %v1801 = vunpack.c.h.b16 %v1644
        %v1802 = vunpack.c.l.b16 %v1645
        %v1803 = vunpack.c.h.b16 %v1645
        %v1804 = vunpack.c.l.b16 %v1646
        %v1805 = vunpack.c.h.b16 %v1646
        %v1806 = vunpack.c.l.b16 %v1647
        %v1807 = vunpack.c.h.b16 %v1647
        %v1808 = vunpack.c.l.b16 %v1648
        %v1809 = vunpack.c.h.b16 %v1648
        %v1810 = vunpack.c.l.b16 %v1649
        %v1811 = vunpack.c.h.b16 %v1649
        %v1812 = vunpack.c.l.b16 %v1650
        %v1813 = vunpack.c.h.b16 %v1650
        %v1814 = vunpack.c.l.b16 %v1651
        %v1815 = vunpack.c.h.b16 %v1651
        %v1816 = vunpack.c.l.b16 %v1652
        %v1817 = vunpack.c.h.b16 %v1652
        %v1818 = vunpack.c.l.b16 %v1653
        %v1819 = vunpack.c.h.b16 %v1653
        %v1820 = vunpack.c.l.b16 %v1654
        %v1821 = vunpack.c.h.b16 %v1654
        %v1822 = vunpack.c.l.b16 %v1655
        %v1823 = vunpack.c.h.b16 %v1655
        %v1824 = vunpack.c.l.b16 %v1656
        %v1825 = vunpack.c.h.b16 %v1656
        %v1826 = vunpack.c.l.b16 %v1657
        %v1827 = vunpack.c.h.b16 %v1657
        %v1828 = vunpack.c.l.b16 %v1658
        %v1829 = vunpack.c.h.b16 %v1658
        %v1830 = vunpack.c.l.b16 %v1659
        %v1831 = vunpack.c.h.b16 %v1659
        %v1832 = vunpack.c.l.b16 %v1660
        %v1833 = vunpack.c.h.b16 %v1660
        %v1834 = vunpack.c.l.b16 %v1661
        %v1835 = vunpack.c.h.b16 %v1661
        %v1836 = vunpack.c.l.b16 %v1662
        %v1837 = vunpack.c.h.b16 %v1662
        %v1838 = vunpack.c.l.b16 %v1663
        %v1839 = vunpack.c.h.b16 %v1663
        %v1840 = vunpack.c.l.b16 %v1664
        %v1841 = vunpack.c.h.b16 %v1664
        %v1842 = vunpack.c.l.b16 %v1665
        %v1843 = vunpack.c.h.b16 %v1665
        %v1844 = vunpack.c.l.b16 %v1666
        %v1845 = vunpack.c.h.b16 %v1666
        %v1846 = vunpack.c.l.b16 %v1667
        %v1847 = vunpack.c.h.b16 %v1667
        %v1848 = vunpack.c.l.b16 %v1668
        %v1849 = vunpack.c.h.b16 %v1668
        %v1850 = vunpack.c.l.b16 %v1669
        %v1851 = vunpack.c.h.b16 %v1669
        %v1852 = vunpack.c.l.b16 %v1670
        %v1853 = vunpack.c.h.b16 %v1670
        %v1854 = vunpack.c.l.b16 %v1671
        %v1855 = vunpack.c.h.b16 %v1671
        %v1856 = vunpack.c.l.b16 %v1672
        %v1857 = vunpack.c.h.b16 %v1672
        %v1858 = vunpack.c.l.b16 %v1673
        %v1859 = vunpack.c.h.b16 %v1673
        %v1860 = vunpack.c.l.b16 %v1674
        %v1861 = vunpack.c.h.b16 %v1674
        %v1862 = vunpack.c.l.b16 %v1675
        %v1863 = vunpack.c.h.b16 %v1675
        %v1864 = vunpack.c.l.b16 %v1676
        %v1865 = vunpack.c.h.b16 %v1676
        %v1866 = vunpack.c.l.b16 %v1677
        %v1867 = vunpack.c.h.b16 %v1677
        %v1868 = vunpack.c.l.b16 %v1678
        %v1869 = vunpack.c.h.b16 %v1678
        %v1870 = vunpack.c.l.b16 %v1679
        %v1871 = vunpack.c.h.b16 %v1679
        %v1872 = vunpack.c.l.b16 %v1680
        %v1873 = vunpack.c.h.b16 %v1680
        %v1874 = vunpack.c.l.b16 %v1681
        %v1875 = vunpack.c.h.b16 %v1681
        %v1876 = vunpack.c.l.b16 %v1682
        %v1877 = vunpack.c.h.b16 %v1682
        %v1878 = vunpack.c.l.b16 %v1683
        %v1879 = vunpack.c.h.b16 %v1683
        %v1880 = vunpack.c.l.b16 %v1684
        %v1881 = vunpack.c.h.b16 %v1684
        %v1882 = vunpack.c.l.b16 %v1685
        %v1883 = vunpack.c.h.b16 %v1685
        %v1884 = vpack.c.b16 %v1758, %v1756
        %v1885 = vpack.c.b16 %v1759, %v1757
        %v1886 = vpack.c.b16 %v1762, %v1760
        %v1887 = vpack.c.b16 %v1763, %v1761
        %v1888 = vpack.c.b16 %v1766, %v1764
        %v1889 = vpack.c.b16 %v1767, %v1765
        %v1890 = vpack.c.b16 %v1770, %v1768
        %v1891 = vpack.c.b16 %v1771, %v1769
        %v1892 = vpack.c.b16 %v1774, %v1772
        %v1893 = vpack.c.b16 %v1775, %v1773
        %v1894 = vpack.c.b16 %v1778, %v1776
        %v1895 = vpack.c.b16 %v1779, %v1777
        %v1896 = vpack.c.b16 %v1782, %v1780
        %v1897 = vpack.c.b16 %v1783, %v1781
        %v1898 = vpack.c.b16 %v1786, %v1784
        %v1899 = vpack.c.b16 %v1787, %v1785
        %v1900 = vpack.c.b16 %v1790, %v1788
        %v1901 = vpack.c.b16 %v1791, %v1789
        %v1902 = vpack.c.b16 %v1794, %v1792
        %v1903 = vpack.c.b16 %v1795, %v1793
        %v1904 = vpack.c.b16 %v1798, %v1796
        %v1905 = vpack.c.b16 %v1799, %v1797
        %v1906 = vpack.c.b16 %v1802, %v1800
        %v1907 = vpack.c.b16 %v1803, %v1801
        %v1908 = vpack.c.b16 %v1806, %v1804
        %v1909 = vpack.c.b16 %v1807, %v1805
        %v1910 = vpack.c.b16 %v1810, %v1808
        %v1911 = vpack.c.b16 %v1811, %v1809
        %v1912 = vpack.c.b16 %v1814, %v1812
        %v1913 = vpack.c.b16 %v1815, %v1813
        %v1914 = vpack.c.b16 %v1818, %v1816
        %v1915 = vpack.c.b16 %v1819, %v1817
        %v1916 = vpack.c.b16 %v1822, %v1820
        %v1917 = vpack.c.b16 %v1823, %v1821
        %v1918 = vpack.c.b16 %v1826, %v1824
        %v1919 = vpack.c.b16 %v1827, %v1825
        %v1920 = vpack.c.b16 %v1830, %v1828
        %v1921 = vpack.c.b16 %v1831, %v1829
        %v1922 = vpack.c.b16 %v1834, %v1832
        %v1923 = vpack.c.b16 %v1835, %v1833
        %v1924 = vpack.c.b16 %v1838, %v1836
        %v1925 = vpack.c.b16 %v1839, %v1837
        %v1926 = vpack.c.b16 %v1842, %v1840
        %v1927 = vpack.c.b16 %v1843, %v1841
        %v1928 = vpack.c.b16 %v1846, %v1844
        %v1929 = vpack.c.b16 %v1847, %v1845
        %v1930 = vpack.c.b16 %v1850, %v1848
        %v1931 = vpack.c.b16 %v1851, %v1849
        %v1932 = vpack.c.b16 %v1854, %v1852
        %v1933 = vpack.c.b16 %v1855, %v1853
        %v1934 = vpack.c.b16 %v1858, %v1856
        %v1935 = vpack.c.b16 %v1859, %v1857
        %v1936 = vpack.c.b16 %v1862, %v1860
        %v1937 = vpack.c.b16 %v1863, %v1861
        %v1938 = vpack.c.b16 %v1866, %v1864
        %v1939 = vpack.c.b16 %v1867, %v1865
        %v1940 = vpack.c.b16 %v1870, %v1868
        %v1941 = vpack.c.b16 %v1871, %v1869
        %v1942 = vpack.c.b16 %v1874, %v1872
        %v1943 = vpack.c.b16 %v1875, %v1873
        %v1944 = vpack.c.b16 %v1878, %v1876
        %v1945 = vpack.c.b16 %v1879, %v1877
        %v1946 = vpack.c.b16 %v1882, %v1880
        %v1947 = vpack.c.b16 %v1883, %v1881
        %2012 = vmatpush.bf16.msra.mxu0 %v1898
        %2013 = vmatpush.bf16.msra.mxu0 %v1896
        %2014 = vmatpush.bf16.msra.mxu0 %v1894
        %2015 = vmatpush.bf16.msra.mxu0 %v1892
        %2016 = vmatpush.bf16.msra.mxu0 %v1890
        %2017 = vmatpush.bf16.msra.mxu0 %v1888
        %2018 = vmatpush.bf16.msra.mxu0 %v1886
        %2019 = vmatpush.bf16.msra.mxu0 %v1884
        %2020 = vmatmul.bf16.gmra.mxu0 %v1590
        %v2021 = vpop.f32.mrf.mxu0
        %v2022 = vadd.f32 %v1688, %v2021
        %v2023 = vpop.f32.mrf.mxu0
        %v2024 = vadd.f32 %v1688, %v2023
        %2025 = vmatmul.bf16.gmra.mxu0 %v1594
        %v2026 = vpop.f32.mrf.mxu0
        %v2027 = vadd.f32 %v1688, %v2026
        %v2028 = vpop.f32.mrf.mxu0
        %v2029 = vadd.f32 %v1688, %v2028
        %2030 = vmatmul.bf16.gmra.mxu0 %v1598
        %v2031 = vpop.f32.mrf.mxu0
        %v2032 = vadd.f32 %v1688, %v2031
        %v2033 = vpop.f32.mrf.mxu0
        %v2034 = vadd.f32 %v1688, %v2033
        %2035 = vmatmul.bf16.gmra.mxu0 %v1602
        %v2036 = vpop.f32.mrf.mxu0
        %v2037 = vadd.f32 %v1688, %v2036
        %v2038 = vpop.f32.mrf.mxu0
        %v2039 = vadd.f32 %v1688, %v2038
        %2040 = vmatmul.bf16.gmra.mxu0 %v1606
        %v2041 = vpop.f32.mrf.mxu0
        %v2042 = vadd.f32 %v1688, %v2041
        %v2043 = vpop.f32.mrf.mxu0
        %v2044 = vadd.f32 %v1688, %v2043
        %2045 = vmatmul.bf16.gmra.mxu0 %v1610
        %v2046 = vpop.f32.mrf.mxu0
        %v2047 = vadd.f32 %v1688, %v2046
        %v2048 = vpop.f32.mrf.mxu0
        %v2049 = vadd.f32 %v1688, %v2048
        %2050 = vmatmul.bf16.gmra.mxu0 %v1614
        %v2051 = vpop.f32.mrf.mxu0
        %v2052 = vadd.f32 %v1688, %v2051
        %v2053 = vpop.f32.mrf.mxu0
        %v2054 = vadd.f32 %v1688, %v2053
        %2055 = vmatmul.bf16.gmra.mxu0 %v1618
        %v2056 = vpop.f32.mrf.mxu0
        %v2057 = vadd.f32 %v1688, %v2056
        %v2058 = vpop.f32.mrf.mxu0
        %v2059 = vadd.f32 %v1688, %v2058
        %2060 = vdwg.mxu0
        %2061 = vmatpush.bf16.msra.mxu0 %v1914
        %2062 = vmatpush.bf16.msra.mxu0 %v1912
        %2063 = vmatpush.bf16.msra.mxu0 %v1910
        %2064 = vmatpush.bf16.msra.mxu0 %v1908
        %2065 = vmatpush.bf16.msra.mxu0 %v1906
        %2066 = vmatpush.bf16.msra.mxu0 %v1904
        %2067 = vmatpush.bf16.msra.mxu0 %v1902
        %2068 = vmatpush.bf16.msra.mxu0 %v1900
        %2069 = vmatmul.bf16.gmra.mxu0 %v1591
        %v2070 = vpop.f32.mrf.mxu0
        %v2071 = vadd.f32 %v2022, %v2070
        %v2072 = vpop.f32.mrf.mxu0
        %v2073 = vadd.f32 %v2024, %v2072
        %2074 = vmatmul.bf16.gmra.mxu0 %v1595
        %v2075 = vpop.f32.mrf.mxu0
        %v2076 = vadd.f32 %v2027, %v2075
        %v2077 = vpop.f32.mrf.mxu0
        %v2078 = vadd.f32 %v2029, %v2077
        %2079 = vmatmul.bf16.gmra.mxu0 %v1599
        %v2080 = vpop.f32.mrf.mxu0
        %v2081 = vadd.f32 %v2032, %v2080
        %v2082 = vpop.f32.mrf.mxu0
        %v2083 = vadd.f32 %v2034, %v2082
        %2084 = vmatmul.bf16.gmra.mxu0 %v1603
        %v2085 = vpop.f32.mrf.mxu0
        %v2086 = vadd.f32 %v2037, %v2085
        %v2087 = vpop.f32.mrf.mxu0
        %v2088 = vadd.f32 %v2039, %v2087
        %2089 = vmatmul.bf16.gmra.mxu0 %v1607
        %v2090 = vpop.f32.mrf.mxu0
        %v2091 = vadd.f32 %v2042, %v2090
        %v2092 = vpop.f32.mrf.mxu0
        %v2093 = vadd.f32 %v2044, %v2092
        %2094 = vmatmul.bf16.gmra.mxu0 %v1611
        %v2095 = vpop.f32.mrf.mxu0
        %v2096 = vadd.f32 %v2047, %v2095
        %v2097 = vpop.f32.mrf.mxu0
        %v2098 = vadd.f32 %v2049, %v2097
        %2099 = vmatmul.bf16.gmra.mxu0 %v1615
        %v2100 = vpop.f32.mrf.mxu0
        %v2101 = vadd.f32 %v2052, %v2100
        %v2102 = vpop.f32.mrf.mxu0
        %v2103 = vadd.f32 %v2054, %v2102
        %2104 = vmatmul.bf16.gmra.mxu0 %v1619
        %v2105 = vpop.f32.mrf.mxu0
        %v2106 = vadd.f32 %v2057, %v2105
        %v2107 = vpop.f32.mrf.mxu0
        %v2108 = vadd.f32 %v2059, %v2107
        %2109 = vdwg.mxu0
        %2110 = vmatpush.bf16.msra.mxu0 %v1930
        %2111 = vmatpush.bf16.msra.mxu0 %v1928
        %2112 = vmatpush.bf16.msra.mxu0 %v1926
        %2113 = vmatpush.bf16.msra.mxu0 %v1924
        %2114 = vmatpush.bf16.msra.mxu0 %v1922
        %2115 = vmatpush.bf16.msra.mxu0 %v1920
        %2116 = vmatpush.bf16.msra.mxu0 %v1918
        %2117 = vmatpush.bf16.msra.mxu0 %v1916
        %2118 = vmatmul.bf16.gmra.mxu0 %v1592
        %v2119 = vpop.f32.mrf.mxu0
        %v2120 = vadd.f32 %v2071, %v2119
        %v2121 = vpop.f32.mrf.mxu0
        %v2122 = vadd.f32 %v2073, %v2121
        %2123 = vmatmul.bf16.gmra.mxu0 %v1596
        %v2124 = vpop.f32.mrf.mxu0
        %v2125 = vadd.f32 %v2076, %v2124
        %v2126 = vpop.f32.mrf.mxu0
        %v2127 = vadd.f32 %v2078, %v2126
        %2128 = vmatmul.bf16.gmra.mxu0 %v1600
        %v2129 = vpop.f32.mrf.mxu0
        %v2130 = vadd.f32 %v2081, %v2129
        %v2131 = vpop.f32.mrf.mxu0
        %v2132 = vadd.f32 %v2083, %v2131
        %2133 = vmatmul.bf16.gmra.mxu0 %v1604
        %v2134 = vpop.f32.mrf.mxu0
        %v2135 = vadd.f32 %v2086, %v2134
        %v2136 = vpop.f32.mrf.mxu0
        %v2137 = vadd.f32 %v2088, %v2136
        %2138 = vmatmul.bf16.gmra.mxu0 %v1608
        %v2139 = vpop.f32.mrf.mxu0
        %v2140 = vadd.f32 %v2091, %v2139
        %v2141 = vpop.f32.mrf.mxu0
        %v2142 = vadd.f32 %v2093, %v2141
        %2143 = vmatmul.bf16.gmra.mxu0 %v1612
        %v2144 = vpop.f32.mrf.mxu0
        %v2145 = vadd.f32 %v2096, %v2144
        %v2146 = vpop.f32.mrf.mxu0
        %v2147 = vadd.f32 %v2098, %v2146
        %2148 = vmatmul.bf16.gmra.mxu0 %v1616
        %v2149 = vpop.f32.mrf.mxu0
        %v2150 = vadd.f32 %v2101, %v2149
        %v2151 = vpop.f32.mrf.mxu0
        %v2152 = vadd.f32 %v2103, %v2151
        %2153 = vmatmul.bf16.gmra.mxu0 %v1620
        %v2154 = vpop.f32.mrf.mxu0
        %v2155 = vadd.f32 %v2106, %v2154
        %v2156 = vpop.f32.mrf.mxu0
        %v2157 = vadd.f32 %v2108, %v2156
        %2158 = vdwg.mxu0
        %2159 = vmatpush.bf16.msra.mxu0 %v1946
        %2160 = vmatpush.bf16.msra.mxu0 %v1944
        %2161 = vmatpush.bf16.msra.mxu0 %v1942
        %2162 = vmatpush.bf16.msra.mxu0 %v1940
        %2163 = vmatpush.bf16.msra.mxu0 %v1938
        %2164 = vmatpush.bf16.msra.mxu0 %v1936
        %2165 = vmatpush.bf16.msra.mxu0 %v1934
        %2166 = vmatpush.bf16.msra.mxu0 %v1932
        %2167 = vmatmul.bf16.gmra.mxu0 %v1593
        %v2168 = vpop.f32.mrf.mxu0
        %v2169 = vadd.f32 %v2120, %v2168
        %v2170 = vpop.f32.mrf.mxu0
        %v2171 = vadd.f32 %v2122, %v2170
        %2172 = vmatmul.bf16.gmra.mxu0 %v1597
        %v2173 = vpop.f32.mrf.mxu0
        %v2174 = vadd.f32 %v2125, %v2173
        %v2175 = vpop.f32.mrf.mxu0
        %v2176 = vadd.f32 %v2127, %v2175
        %2177 = vmatmul.bf16.gmra.mxu0 %v1601
        %v2178 = vpop.f32.mrf.mxu0
        %v2179 = vadd.f32 %v2130, %v2178
        %v2180 = vpop.f32.mrf.mxu0
        %v2181 = vadd.f32 %v2132, %v2180
        %2182 = vmatmul.bf16.gmra.mxu0 %v1605
        %v2183 = vpop.f32.mrf.mxu0
        %v2184 = vadd.f32 %v2135, %v2183
        %v2185 = vpop.f32.mrf.mxu0
        %v2186 = vadd.f32 %v2137, %v2185
        %2187 = vmatmul.bf16.gmra.mxu0 %v1609
        %v2188 = vpop.f32.mrf.mxu0
        %v2189 = vadd.f32 %v2140, %v2188
        %v2190 = vpop.f32.mrf.mxu0
        %v2191 = vadd.f32 %v2142, %v2190
        %2192 = vmatmul.bf16.gmra.mxu0 %v1613
        %v2193 = vpop.f32.mrf.mxu0
        %v2194 = vadd.f32 %v2145, %v2193
        %v2195 = vpop.f32.mrf.mxu0
        %v2196 = vadd.f32 %v2147, %v2195
        %2197 = vmatmul.bf16.gmra.mxu0 %v1617
        %v2198 = vpop.f32.mrf.mxu0
        %v2199 = vadd.f32 %v2150, %v2198
        %v2200 = vpop.f32.mrf.mxu0
        %v2201 = vadd.f32 %v2152, %v2200
        %2202 = vmatmul.bf16.gmra.mxu0 %v1621
        %v2203 = vpop.f32.mrf.mxu0
        %v2204 = vadd.f32 %v2155, %v2203
        %v2205 = vpop.f32.mrf.mxu0
        %v2206 = vadd.f32 %v2157, %v2205
        %2207 = vdwg.mxu0
        %2208 = vmatpush.bf16.msra.mxu0 %v1899
        %2209 = vmatpush.bf16.msra.mxu0 %v1897
        %2210 = vmatpush.bf16.msra.mxu0 %v1895
        %2211 = vmatpush.bf16.msra.mxu0 %v1893
        %2212 = vmatpush.bf16.msra.mxu0 %v1891
        %2213 = vmatpush.bf16.msra.mxu0 %v1889
        %2214 = vmatpush.bf16.msra.mxu0 %v1887
        %2215 = vmatpush.bf16.msra.mxu0 %v1885
        %2216 = vmatmul.bf16.gmra.mxu0 %v1590
        %v2217 = vpop.f32.mrf.mxu0
        %v2218 = vadd.f32 %v1689, %v2217
        %v2219 = vpop.f32.mrf.mxu0
        %v2220 = vadd.f32 %v1689, %v2219
        %2221 = vmatmul.bf16.gmra.mxu0 %v1594
        %v2222 = vpop.f32.mrf.mxu0
        %v2223 = vadd.f32 %v1689, %v2222
        %v2224 = vpop.f32.mrf.mxu0
        %v2225 = vadd.f32 %v1689, %v2224
        %2226 = vmatmul.bf16.gmra.mxu0 %v1598
        %v2227 = vpop.f32.mrf.mxu0
        %v2228 = vadd.f32 %v1689, %v2227
        %v2229 = vpop.f32.mrf.mxu0
        %v2230 = vadd.f32 %v1689, %v2229
        %2231 = vmatmul.bf16.gmra.mxu0 %v1602
        %v2232 = vpop.f32.mrf.mxu0
        %v2233 = vadd.f32 %v1689, %v2232
        %v2234 = vpop.f32.mrf.mxu0
        %v2235 = vadd.f32 %v1689, %v2234
        %2236 = vmatmul.bf16.gmra.mxu0 %v1606
        %v2237 = vpop.f32.mrf.mxu0
        %v2238 = vadd.f32 %v1689, %v2237
        %v2239 = vpop.f32.mrf.mxu0
        %v2240 = vadd.f32 %v1689, %v2239
        %2241 = vmatmul.bf16.gmra.mxu0 %v1610
        %v2242 = vpop.f32.mrf.mxu0
        %v2243 = vadd.f32 %v1689, %v2242
        %v2244 = vpop.f32.mrf.mxu0
        %v2245 = vadd.f32 %v1689, %v2244
        %2246 = vmatmul.bf16.gmra.mxu0 %v1614
        %v2247 = vpop.f32.mrf.mxu0
        %v2248 = vadd.f32 %v1689, %v2247
        %v2249 = vpop.f32.mrf.mxu0
        %v2250 = vadd.f32 %v1689, %v2249
        %2251 = vmatmul.bf16.gmra.mxu0 %v1618
        %v2252 = vpop.f32.mrf.mxu0
        %v2253 = vadd.f32 %v1689, %v2252
        %v2254 = vpop.f32.mrf.mxu0
        %v2255 = vadd.f32 %v1689, %v2254
        %2256 = vdwg.mxu0
        %2257 = vmatpush.bf16.msra.mxu0 %v1915
        %2258 = vmatpush.bf16.msra.mxu0 %v1913
        %2259 = vmatpush.bf16.msra.mxu0 %v1911
        %2260 = vmatpush.bf16.msra.mxu0 %v1909
        %2261 = vmatpush.bf16.msra.mxu0 %v1907
        %2262 = vmatpush.bf16.msra.mxu0 %v1905
        %2263 = vmatpush.bf16.msra.mxu0 %v1903
        %2264 = vmatpush.bf16.msra.mxu0 %v1901
        %2265 = vmatmul.bf16.gmra.mxu0 %v1591
        %v2266 = vpop.f32.mrf.mxu0
        %v2267 = vadd.f32 %v2218, %v2266
        %v2268 = vpop.f32.mrf.mxu0
        %v2269 = vadd.f32 %v2220, %v2268
        %2270 = vmatmul.bf16.gmra.mxu0 %v1595
        %v2271 = vpop.f32.mrf.mxu0
        %v2272 = vadd.f32 %v2223, %v2271
        %v2273 = vpop.f32.mrf.mxu0
        %v2274 = vadd.f32 %v2225, %v2273
        %2275 = vmatmul.bf16.gmra.mxu0 %v1599
        %v2276 = vpop.f32.mrf.mxu0
        %v2277 = vadd.f32 %v2228, %v2276
        %v2278 = vpop.f32.mrf.mxu0
        %v2279 = vadd.f32 %v2230, %v2278
        %2280 = vmatmul.bf16.gmra.mxu0 %v1603
        %v2281 = vpop.f32.mrf.mxu0
        %v2282 = vadd.f32 %v2233, %v2281
        %v2283 = vpop.f32.mrf.mxu0
        %v2284 = vadd.f32 %v2235, %v2283
        %2285 = vmatmul.bf16.gmra.mxu0 %v1607
        %v2286 = vpop.f32.mrf.mxu0
        %v2287 = vadd.f32 %v2238, %v2286
        %v2288 = vpop.f32.mrf.mxu0
        %v2289 = vadd.f32 %v2240, %v2288
        %2290 = vmatmul.bf16.gmra.mxu0 %v1611
        %v2291 = vpop.f32.mrf.mxu0
        %v2292 = vadd.f32 %v2243, %v2291
        %v2293 = vpop.f32.mrf.mxu0
        %v2294 = vadd.f32 %v2245, %v2293
        %2295 = vmatmul.bf16.gmra.mxu0 %v1615
        %v2296 = vpop.f32.mrf.mxu0
        %v2297 = vadd.f32 %v2248, %v2296
        %v2298 = vpop.f32.mrf.mxu0
        %v2299 = vadd.f32 %v2250, %v2298
        %2300 = vmatmul.bf16.gmra.mxu0 %v1619
        %v2301 = vpop.f32.mrf.mxu0
        %v2302 = vadd.f32 %v2253, %v2301
        %v2303 = vpop.f32.mrf.mxu0
        %v2304 = vadd.f32 %v2255, %v2303
        %2305 = vdwg.mxu0
        %2306 = vmatpush.bf16.msra.mxu0 %v1931
        %2307 = vmatpush.bf16.msra.mxu0 %v1929
        %2308 = vmatpush.bf16.msra.mxu0 %v1927
        %2309 = vmatpush.bf16.msra.mxu0 %v1925
        %2310 = vmatpush.bf16.msra.mxu0 %v1923
        %2311 = vmatpush.bf16.msra.mxu0 %v1921
        %2312 = vmatpush.bf16.msra.mxu0 %v1919
        %2313 = vmatpush.bf16.msra.mxu0 %v1917
        %2314 = vmatmul.bf16.gmra.mxu0 %v1592
        %v2315 = vpop.f32.mrf.mxu0
        %v2316 = vadd.f32 %v2267, %v2315
        %v2317 = vpop.f32.mrf.mxu0
        %v2318 = vadd.f32 %v2269, %v2317
        %2319 = vmatmul.bf16.gmra.mxu0 %v1596
        %v2320 = vpop.f32.mrf.mxu0
        %v2321 = vadd.f32 %v2272, %v2320
        %v2322 = vpop.f32.mrf.mxu0
        %v2323 = vadd.f32 %v2274, %v2322
        %2324 = vmatmul.bf16.gmra.mxu0 %v1600
        %v2325 = vpop.f32.mrf.mxu0
        %v2326 = vadd.f32 %v2277, %v2325
        %v2327 = vpop.f32.mrf.mxu0
        %v2328 = vadd.f32 %v2279, %v2327
        %2329 = vmatmul.bf16.gmra.mxu0 %v1604
        %v2330 = vpop.f32.mrf.mxu0
        %v2331 = vadd.f32 %v2282, %v2330
        %v2332 = vpop.f32.mrf.mxu0
        %v2333 = vadd.f32 %v2284, %v2332
        %2334 = vmatmul.bf16.gmra.mxu0 %v1608
        %v2335 = vpop.f32.mrf.mxu0
        %v2336 = vadd.f32 %v2287, %v2335
        %v2337 = vpop.f32.mrf.mxu0
        %v2338 = vadd.f32 %v2289, %v2337
        %2339 = vmatmul.bf16.gmra.mxu0 %v1612
        %v2340 = vpop.f32.mrf.mxu0
        %v2341 = vadd.f32 %v2292, %v2340
        %v2342 = vpop.f32.mrf.mxu0
        %v2343 = vadd.f32 %v2294, %v2342
        %2344 = vmatmul.bf16.gmra.mxu0 %v1616
        %v2345 = vpop.f32.mrf.mxu0
        %v2346 = vadd.f32 %v2297, %v2345
        %v2347 = vpop.f32.mrf.mxu0
        %v2348 = vadd.f32 %v2299, %v2347
        %2349 = vmatmul.bf16.gmra.mxu0 %v1620
        %v2350 = vpop.f32.mrf.mxu0
        %v2351 = vadd.f32 %v2302, %v2350
        %v2352 = vpop.f32.mrf.mxu0
        %v2353 = vadd.f32 %v2304, %v2352
        %2354 = vdwg.mxu0
        %2355 = vmatpush.bf16.msra.mxu0 %v1947
        %2356 = vmatpush.bf16.msra.mxu0 %v1945
        %2357 = vmatpush.bf16.msra.mxu0 %v1943
        %2358 = vmatpush.bf16.msra.mxu0 %v1941
        %2359 = vmatpush.bf16.msra.mxu0 %v1939
        %2360 = vmatpush.bf16.msra.mxu0 %v1937
        %2361 = vmatpush.bf16.msra.mxu0 %v1935
        %2362 = vmatpush.bf16.msra.mxu0 %v1933
        %2363 = vmatmul.bf16.gmra.mxu0 %v1593
        %v2364 = vpop.f32.mrf.mxu0
        %v2365 = vadd.f32 %v2316, %v2364
        %v2366 = vpop.f32.mrf.mxu0
        %v2367 = vadd.f32 %v2318, %v2366
        %2368 = vmatmul.bf16.gmra.mxu0 %v1597
        %v2369 = vpop.f32.mrf.mxu0
        %v2370 = vadd.f32 %v2321, %v2369
        %v2371 = vpop.f32.mrf.mxu0
        %v2372 = vadd.f32 %v2323, %v2371
        %2373 = vmatmul.bf16.gmra.mxu0 %v1601
        %v2374 = vpop.f32.mrf.mxu0
        %v2375 = vadd.f32 %v2326, %v2374
        %v2376 = vpop.f32.mrf.mxu0
        %v2377 = vadd.f32 %v2328, %v2376
        %2378 = vmatmul.bf16.gmra.mxu0 %v1605
        %v2379 = vpop.f32.mrf.mxu0
        %v2380 = vadd.f32 %v2331, %v2379
        %v2381 = vpop.f32.mrf.mxu0
        %v2382 = vadd.f32 %v2333, %v2381
        %2383 = vmatmul.bf16.gmra.mxu0 %v1609
        %v2384 = vpop.f32.mrf.mxu0
        %v2385 = vadd.f32 %v2336, %v2384
        %v2386 = vpop.f32.mrf.mxu0
        %v2387 = vadd.f32 %v2338, %v2386
        %2388 = vmatmul.bf16.gmra.mxu0 %v1613
        %v2389 = vpop.f32.mrf.mxu0
        %v2390 = vadd.f32 %v2341, %v2389
        %v2391 = vpop.f32.mrf.mxu0
        %v2392 = vadd.f32 %v2343, %v2391
        %2393 = vmatmul.bf16.gmra.mxu0 %v1617
        %v2394 = vpop.f32.mrf.mxu0
        %v2395 = vadd.f32 %v2346, %v2394
        %v2396 = vpop.f32.mrf.mxu0
        %v2397 = vadd.f32 %v2348, %v2396
        %2398 = vmatmul.bf16.gmra.mxu0 %v1621
        %v2399 = vpop.f32.mrf.mxu0
        %v2400 = vadd.f32 %v2351, %v2399
        %v2401 = vpop.f32.mrf.mxu0
        %v2402 = vadd.f32 %v2353, %v2401
        %2403 = vdwg.mxu0
        %v2404 = vmax.f32 %v2169, 0.0
        %v2405 = vmax.f32 %v2365, 0.0
        %v2406 = vmax.f32 %v2171, 0.0
        %v2407 = vmax.f32 %v2367, 0.0
        %v2408 = vmax.f32 %v2174, 0.0
        %v2409 = vmax.f32 %v2370, 0.0
        %v2410 = vmax.f32 %v2176, 0.0
        %v2411 = vmax.f32 %v2372, 0.0
        %v2412 = vmax.f32 %v2179, 0.0
        %v2413 = vmax.f32 %v2375, 0.0
        %v2414 = vmax.f32 %v2181, 0.0
        %v2415 = vmax.f32 %v2377, 0.0
        %v2416 = vmax.f32 %v2184, 0.0
        %v2417 = vmax.f32 %v2380, 0.0
        %v2418 = vmax.f32 %v2186, 0.0
        %v2419 = vmax.f32 %v2382, 0.0
        %v2420 = vmax.f32 %v2189, 0.0
        %v2421 = vmax.f32 %v2385, 0.0
        %v2422 = vmax.f32 %v2191, 0.0
        %v2423 = vmax.f32 %v2387, 0.0
        %v2424 = vmax.f32 %v2194, 0.0
        %v2425 = vmax.f32 %v2390, 0.0
        %v2426 = vmax.f32 %v2196, 0.0
        %v2427 = vmax.f32 %v2392, 0.0
        %v2428 = vmax.f32 %v2199, 0.0
        %v2429 = vmax.f32 %v2395, 0.0
        %v2430 = vmax.f32 %v2201, 0.0
        %v2431 = vmax.f32 %v2397, 0.0
        %v2432 = vmax.f32 %v2204, 0.0
        %v2433 = vmax.f32 %v2400, 0.0
        %v2434 = vmax.f32 %v2206, 0.0
        %v2435 = vmax.f32 %v2402, 0.0
        %2436 = vst [vmem:[%s342] sm:$0xff] %v2404
        %2437 = vst [vmem:[%s342 + $0x8] sm:$0xff] %v2405
        %2438 = vst [vmem:[%s342 + $0x10] sm:$0xff] %v2406
        %2439 = vst [vmem:[%s342 + $0x18] sm:$0xff] %v2407
        %2440 = vst [vmem:[%s342 + $0x20] sm:$0xff] %v2408
        %2441 = vst [vmem:[%s342 + $0x28] sm:$0xff] %v2409
        %2442 = vst [vmem:[%s342 + $0x30] sm:$0xff] %v2410
        %2443 = vst [vmem:[%s342 + $0x38] sm:$0xff] %v2411
        %2444 = vst [vmem:[%s342 + $0x40] sm:$0xff] %v2412
        %2445 = vst [vmem:[%s342 + $0x48] sm:$0xff] %v2413
        %2446 = vst [vmem:[%s342 + $0x50] sm:$0xff] %v2414
        %2447 = vst [vmem:[%s342 + $0x58] sm:$0xff] %v2415
        %2448 = vst [vmem:[%s342 + $0x60] sm:$0xff] %v2416
        %2449 = vst [vmem:[%s342 + $0x68] sm:$0xff] %v2417
        %2450 = vst [vmem:[%s342 + $0x70] sm:$0xff] %v2418
        %2451 = vst [vmem:[%s342 + $0x78] sm:$0xff] %v2419
        %2452 = vst [vmem:[%s342 + $0x80] sm:$0xff] %v2420
        %2453 = vst [vmem:[%s342 + $0x88] sm:$0xff] %v2421
        %2454 = vst [vmem:[%s342 + $0x90] sm:$0xff] %v2422
        %2455 = vst [vmem:[%s342 + $0x98] sm:$0xff] %v2423
        %2456 = vst [vmem:[%s342 + $0xa0] sm:$0xff] %v2424
        %2457 = vst [vmem:[%s342 + $0xa8] sm:$0xff] %v2425
        %2458 = vst [vmem:[%s342 + $0xb0] sm:$0xff] %v2426
        %2459 = vst [vmem:[%s342 + $0xb8] sm:$0xff] %v2427
        %2460 = vst [vmem:[%s342 + $0xc0] sm:$0xff] %v2428
        %2461 = vst [vmem:[%s342 + $0xc8] sm:$0xff] %v2429
        %2462 = vst [vmem:[%s342 + $0xd0] sm:$0xff] %v2430
        %2463 = vst [vmem:[%s342 + $0xd8] sm:$0xff] %v2431
        %2464 = vst [vmem:[%s342 + $0xe0] sm:$0xff] %v2432
        %2465 = vst [vmem:[%s342 + $0xe8] sm:$0xff] %v2433
        %2466 = vst [vmem:[%s342 + $0xf0] sm:$0xff] %v2434
        %2467 = vst [vmem:[%s342 + $0xf8] sm:$0xff] %v2435
        %s2468 = sand.u32 %s207, 1
        %s2469 = scalar_lea.sflag [#allocation5], %s2468
        %s2470 = sand.u32 %s207, 1
        %s2471 = smul.addr %s2470, 256
        %s2472 = scalar_lea.vmem [#allocation8], %s2471
        // Predicated region
        $region61: #{tpu_custom_call.1} parent=47 // pred_check
          %p2473 = pneg %p217
        $region62: #{tpu_custom_call.1} parent=47 // pred_check_branch
          %2475 = sbr.rel (%p2473) target = $region64
        $region63: #{tpu_custom_call.1} parent=47 // pred_region
          %s2476 = smul.u32 16, %s27
          %s2477 = smul.u32 2, %s28
          %2479 = vsyncadd %s2469, 0
          %s2480 = smul.addr %s2476, 2
          %s2481 = sadd.s32 %s2477, %s2480
          %s2482 = smul.addr %s2481, 8
          %s2483 = scalar_lea.hbm %s7, %s2482
          %s2484 = sshll.u32 %s2472, 4
          %s2485 = int_to_ptr.vmem [resolvable:$true] %s2484
          %s2486 = sshll.u32 %s2483, 4
          %s2487 = int_to_ptr.hbm [resolvable:$true] %s2486
          %2492 = dma.vmem_to_hbm [thread:$0]  %s2485, 4096, %s2487, %s2469, 256, 256, 16
        $region64: #{tpu_custom_call.1} parent=47 // pred_fallthru
          _
      $region48: #{tpu_custom_call.1} parent=5 // pred_fallthru
        _
      %p2493 = scmp.le.s32.totalorder 2, %s18
      // Predicated region
      $region65: #{tpu_custom_call.1} parent=5 // pred_check
        %p2494 = pneg %p2493
      $region66: #{tpu_custom_call.1} parent=5 // pred_check_branch
        %2496 = sbr.rel (%p2494) target = $region68
      $region67: #{tpu_custom_call.1} parent=5 // pred_region
        %s2497 = ssub.s32 %s18, 2
        // Predicated region
        $region69: #{tpu_custom_call.1} parent=67 // pred_check
          %p2498 = pneg %p223
        $region70: #{tpu_custom_call.1} parent=67 // pred_check_branch
          %2500 = sbr.rel (%p2498) target = $region72
        $region71: #{tpu_custom_call.1} parent=67 // pred_region
          %s2501 = sand.u32 %s208, 1
          %s2502 = scalar_lea.sflag [#allocation5], %s2501
          %s2503 = sand.u32 %s208, 1
          %s2504 = smul.addr %s2503, 256
          %s2505 = scalar_lea.vmem [#allocation8], %s2504
          %2507 = dma.done %s2502, 4096
        $region72: #{tpu_custom_call.1} parent=67 // pred_fallthru
          _
      $region68: #{tpu_custom_call.1} parent=5 // pred_fallthru
        _
    $region6: #{tpu_custom_call.1} parent=1 // loop_footer
      %s22 = sadd.s32 1, %s18
    $region7: #{tpu_custom_call.1} parent=1 // loop_footer_branch
      %17 = sbr.rel target = $region3
    $region8: #{tpu_custom_call.1} parent=1 // loop_exit
      _
    %2508 = vsyncpa [#allocation4], 1
    %s2509 = scalar_lea.sflag [#allocation4], 1
    %2510 = vsyncpa %s2509, 1
    %2511 = vsyncpa [#allocation7], 1
    %2512 = vsyncpa [#allocation5], 1
    %s2513 = scalar_lea.sflag [#allocation5], 1
    %2514 = vsyncpa %s2513, 1

</llo_original>
